<compile_context>
chip_gen: v7x
topology: tpu7x:2x2x1
jax: 0.10.0
libtpu: 0.0.40
codegen_flags: <defaults>
</compile_context>

<pallas_src>
import jax
import jax.numpy as jnp
from jax.experimental import pallas as pl
from jax.experimental.pallas import tpu as pltpu

IN_FEATURES = 1024
OUT_FEATURES = 1024


def linear_kernel(x_ref, w_ref, b_ref, o_ref):
    """One-shot matmul + bias for one output-column block.

    x_ref: (M, K)  full LHS (f32), resident across grid steps.
    w_ref: (K, tn) bf16 weight column block -- the only streamed operand.
    b_ref: (1, tn) f32 bias block (broadcasts over rows).
    o_ref: (M, tn) f32 output block, written once (unmasked lane-dense stores).
    """
    w = w_ref[...].astype(jnp.float32)  # cheap VPU upcast in VMEM; HBM read was bf16
    acc = jnp.dot(x_ref[...], w, preferred_element_type=jnp.float32)
    o_ref[...] = (acc + b_ref[...]).astype(o_ref.dtype)


def _default_tn():
    """tn=512 (grid of 2 parallel steps) on 2-TensorCore v7x; full-N otherwise."""
    try:
        kind = jax.devices()[0].device_kind.lower()
    except Exception:
        kind = ""
    return OUT_FEATURES // 2 if "7" in kind else OUT_FEATURES


def linear_pallas(x, w_t, b, *, tn=None):
    """y = x @ w_t + b  with x:(M,K) f32, w_t:(K,N) bf16, b:(N,) f32."""
    M, K = x.shape
    Kw, N = w_t.shape
    assert K == Kw
    if tn is None:
        tn = _default_tn()
    assert N % tn == 0

    b2d = b.reshape(1, N)

    bytes_accessed = (
        x.size * x.dtype.itemsize          # LHS read
        + w_t.size * w_t.dtype.itemsize    # bf16 weight read (dominant)
        + M * N * x.dtype.itemsize         # output write
        + b.size * b.dtype.itemsize        # bias read
    )

    return pl.pallas_call(
        linear_kernel,
        out_shape=jax.ShapeDtypeStruct((M, N), x.dtype),
        grid_spec=pltpu.PrefetchScalarGridSpec(
            num_scalar_prefetch=0,
            grid=(N // tn,),
            in_specs=[
                # Full LHS: constant index_map -> never re-DMA'd per step.
                pl.BlockSpec((M, K), lambda j: (0, 0)),
                # Streamed bf16 weight column block: one big DMA per grid step.
                pl.BlockSpec((K, tn), lambda j: (0, j)),
                # Bias column block (tiny, f32).
                pl.BlockSpec((1, tn), lambda j: (0, j)),
            ],
            out_specs=pl.BlockSpec((M, tn), lambda j: (0, j)),
        ),
        compiler_params=pltpu.CompilerParams(
            # N axis is independent -> shardable across v7x's two TensorCores.
            dimension_semantics=("parallel",),
        ),
        cost_estimate=pl.CostEstimate(
            flops=2 * M * K * N,
            bytes_accessed=bytes_accessed,
            transcendentals=0,
        ),
    )(x, w_t, b2d)


def init_params(key):
    """Deterministic init mimicking nn.Linear default (uniform(+/- 1/sqrt(fan_in)))."""
    kw, kb = jax.random.split(key)
    bound = 1.0 / (IN_FEATURES ** 0.5)
    # PyTorch stores weight as (out_features, in_features).
    weight = jax.random.uniform(
        kw, (OUT_FEATURES, IN_FEATURES), jnp.float32, -bound, bound
    )
    bias = jax.random.uniform(kb, (OUT_FEATURES,), jnp.float32, -bound, bound)
    return weight, bias


if __name__ == "__main__":
    key = jax.random.PRNGKey(0)
    k_x, k_p = jax.random.split(key)

    batch = 8  # multiple of 8 -> full f32 sublanes; in/out fixed at 1024 by the module
    x = jax.random.normal(k_x, (batch, IN_FEATURES), dtype=jnp.float32)
    weight, bias = init_params(k_p)

    # Transpose once to (in_features, out_features) and cast to bf16 once at
    # init; repeated inference reuses this device-resident array.
    # TODO(synk): keep an f32 weight path if the deployed model cannot tolerate
    # bf16 weights (the PyTorch reference is f32).
    w_t = jax.block_until_ready(jnp.asarray(weight.T, dtype=jnp.bfloat16))

    y = linear_pallas(x, w_t, bias)
    y = jax.block_until_ready(y)

    # Reference uses the SAME bf16 weights (upcast to f32) so the check stays
    # tight while still validating the kernel math against x @ W^T + b.
    y_ref = (
        jnp.dot(x, w_t.astype(jnp.float32), precision=jax.lax.Precision.HIGHEST)
        + bias
    )
    assert y.shape == (batch, OUT_FEATURES)
    assert jnp.allclose(y, y_ref, atol=1e-3, rtol=1e-3)

    print("KERNEL_OK")
</pallas_src>

<mosaic_0001>
module attributes {stable_mosaic.version = 11 : i64} {
  func.func @linear_kernel(%arg0: i32, %arg1: memref<8x1024xf32, #tpu.memory_space<vmem>>, %arg2: memref<1024x1024xbf16, #tpu.memory_space<vmem>>, %arg3: memref<1x1024xf32, #tpu.memory_space<vmem>>, %arg4: memref<8x1024xf32, #tpu.memory_space<vmem>>) attributes {dimension_semantics = [#tpu.dimension_semantics<parallel>], iteration_bounds = array<i64: 1>, scalar_prefetch = 0 : i64, scratch_operands = 0 : i64, tpu.core_type = #tpu.core_type<tc>, window_params = [{pipeline_mode = #tpu.pipeline_mode<synchronous>, transform_indices = @transform_0, window_bounds = array<i64: 8, 1024>}, {transform_indices = @transform_1, window_bounds = array<i64: 1024, 1024>}, {transform_indices = @transform_2, window_bounds = array<i64: 1, 1024>}, {transform_indices = @transform_3, window_bounds = array<i64: 8, 1024>}]} {
    %c0 = arith.constant 0 : index
    %c0_0 = arith.constant 0 : index
    %0 = vector.load %arg2[%c0, %c0_0] : memref<1024x1024xbf16, #tpu.memory_space<vmem>>, vector<1024x1024xbf16>
    %1 = arith.extf %0 : vector<1024x1024xbf16> to vector<1024x1024xf32>
    %c0_1 = arith.constant 0 : index
    %c0_2 = arith.constant 0 : index
    %2 = vector.load %arg1[%c0_1, %c0_2] : memref<8x1024xf32, #tpu.memory_space<vmem>>, vector<8x1024xf32>
    %cst = arith.constant dense<0.000000e+00> : vector<8x1024xf32>
    %3 = tpu.matmul %2, %1, %cst {dimension_numbers = #tpu.dot_dimension_numbers<[1], [0], [0], [1], [0, 0, 1, 1], [], []>} : vector<8x1024xf32>, vector<1024x1024xf32>, vector<8x1024xf32> -> vector<8x1024xf32>
    %c0_3 = arith.constant 0 : index
    %c0_4 = arith.constant 0 : index
    %4 = vector.load %arg3[%c0_3, %c0_4] : memref<1x1024xf32, #tpu.memory_space<vmem>>, vector<1x1024xf32>
    %5 = vector.broadcast %4 : vector<1x1024xf32> to vector<8x1024xf32>
    %6 = arith.addf %3, %5 : vector<8x1024xf32>
    %c0_5 = arith.constant 0 : index
    %c0_6 = arith.constant 0 : index
    %7 = vector.load %arg4[%c0_5, %c0_6] : memref<8x1024xf32, #tpu.memory_space<vmem>>, vector<8x1024xf32>
    tpu.vector_store %arg4[%c0_5, %c0_6], %6 {strides = array<i32>} : memref<8x1024xf32, #tpu.memory_space<vmem>>, vector<8x1024xf32>,
    return
  }
  func.func @transform_0(%arg0: i32) -> (i32, i32) {
    %c0_i32 = arith.constant 0 : i32
    %c0_i32_0 = arith.constant 0 : i32
    %c0_i32_1 = arith.constant 0 : i32
    return %c0_i32, %c0_i32_0 : i32, i32
  }
  func.func @transform_1(%arg0: i32) -> (i32, i32) {
    %c0_i32 = arith.constant 0 : i32
    %c0_i32_0 = arith.constant 0 : i32
    return %c0_i32, %arg0 : i32, i32
  }
  func.func @transform_2(%arg0: i32) -> (i32, i32) {
    %c0_i32 = arith.constant 0 : i32
    %c0_i32_0 = arith.constant 0 : i32
    return %c0_i32, %arg0 : i32, i32
  }
  func.func @transform_3(%arg0: i32) -> (i32, i32) {
    %c0_i32 = arith.constant 0 : i32
    %c0_i32_0 = arith.constant 0 : i32
    return %c0_i32, %arg0 : i32, i32
  }
}

</mosaic_0001>

<llo_original>
// kernel: tpu_custom_call.1
$region0: #{tpu_custom_call.1}
  #allocation0 [shape = 'u32[]', space=smem, size = 0x4, offset = 0x4, fixed_abs, tag = 'smem constant byte address 0x4 - core index']
  #allocation1 [shape = 'u32[144,128]{1,0:T(1,128)}', space=vmem, size = 0x12000, scoped, tag = 'internal scratch']
  %s0 = inlined_call_operand.hbm [shape: f32[8,1024], index: 0, kind: input, shape index: {}]
  %s1 = inlined_call_operand.hbm [shape: bf16[1024,1024], index: 1, kind: input, shape index: {}]
  %s2 = inlined_call_operand.hbm [shape: f32[1,1024], index: 2, kind: input, shape index: {}]
  %s3 = inlined_call_operand.hbm [shape: f32[8,1024], index: 3, kind: output, shape index: {}]
  %s4 = sld [smem:[#allocation0]]
  $region34: #{tpu_custom_call.1} parent=0
    _
  %s6 = ssub.s32 1, %s4
  %s7 = scalar_select 0, %s6, %s4
  $region1: #{tpu_custom_call.1} parent=0
    #allocation2 [shape = 'u8[32768]{0}', space=vmem, size = 0x8000, scoped, tag = 'input window, operand 0, single buffered']
    #allocation3 [shape = 's32[1]{0}', space=sflag, size = 0x4, scoped, tag = 'scoped memory for tpu_custom_call.1']
    #allocation4 [shape = 's32[1]{0}', space=sflag, size = 0x4, scoped, tag = 'scoped memory for tpu_custom_call.1']
    #allocation5 [shape = 'u8[2097152]{0}', space=vmem, size = 0x200000, scoped, tag = 'input window, operand 1, single buffered']
    #allocation6 [shape = 's32[1]{0}', space=sflag, size = 0x4, scoped, tag = 'scoped memory for tpu_custom_call.1']
    #allocation7 [shape = 'u8[4096]{0}', space=vmem, size = 0x1000, scoped, tag = 'input window, operand 2, single buffered']
    #allocation8 [shape = 'u8[32768]{0}', space=vmem, size = 0x8000, scoped, tag = 'output window, operand 0, single buffered']
    %8 = vsyncpa [#allocation3], 0
    %9 = vsyncpa [#allocation6], 0
    %10 = vsyncpa [#allocation4], 0
    // Predicated region
    $region2: #{tpu_custom_call.1} parent=1 // pred_check
      _
    $region3: #{tpu_custom_call.1} parent=1 // pred_check_branch
      %12 = sbr.rel (0) target = $region5
    $region4: #{tpu_custom_call.1} parent=1 // pred_region
      %s14 = ssub.s32 1024, 1024
      %15 = vsyncadd [#allocation3], %s14
      %s17 = sshll.u32 [#allocation2], 4
      %s18 = int_to_ptr.vmem [resolvable:$true] %s17
      %20 = dma.hbm_to_vmem [thread:$0]  %s0, 1024, %s18, [#allocation3]
    $region5: #{tpu_custom_call.1} parent=1 // pred_fallthru
      _
    // Predicated region
    $region6: #{tpu_custom_call.1} parent=1 // pred_check
      _
    $region7: #{tpu_custom_call.1} parent=1 // pred_check_branch
      %22 = sbr.rel (0) target = $region9
    $region8: #{tpu_custom_call.1} parent=1 // pred_region
      %s24 = ssub.s32 65536, 65536
      %25 = vsyncadd [#allocation6], %s24
      %s26 = sshll.u32 [#allocation5], 4
      %s27 = int_to_ptr.vmem [resolvable:$true] %s26
      %32 = dma.hbm_to_vmem [thread:$0]  %s1, 65536, %s27, [#allocation6], 512, 512, 32
    $region9: #{tpu_custom_call.1} parent=1 // pred_fallthru
      _
    // Predicated region
    $region10: #{tpu_custom_call.1} parent=1 // pred_check
      _
    $region11: #{tpu_custom_call.1} parent=1 // pred_check_branch
      %34 = sbr.rel (0) target = $region13
    $region12: #{tpu_custom_call.1} parent=1 // pred_region
      %s36 = ssub.s32 128, 128
      %37 = vsyncadd [#allocation6], %s36
      %s39 = sshll.u32 [#allocation7], 4
      %s40 = int_to_ptr.vmem [resolvable:$true] %s39
      %42 = dma.hbm_to_vmem [thread:$0]  %s2, 128, %s40, [#allocation6]
    $region13: #{tpu_custom_call.1} parent=1 // pred_fallthru
      _
    // Predicated region
    $region14: #{tpu_custom_call.1} parent=1 // pred_check
      _
    $region15: #{tpu_custom_call.1} parent=1 // pred_check_branch
      %44 = sbr.rel (0) target = $region17
    $region16: #{tpu_custom_call.1} parent=1 // pred_region
      %45 = dma.done [#allocation3], 1024
    $region17: #{tpu_custom_call.1} parent=1 // pred_fallthru
      _
    // Predicated region
    $region18: #{tpu_custom_call.1} parent=1 // pred_check
      _
    $region19: #{tpu_custom_call.1} parent=1 // pred_check_branch
      %47 = sbr.rel (0) target = $region21
    $region20: #{tpu_custom_call.1} parent=1 // pred_region
      %48 = dma.done [#allocation6], 65536
    $region21: #{tpu_custom_call.1} parent=1 // pred_fallthru
      _
    // Predicated region
    $region22: #{tpu_custom_call.1} parent=1 // pred_check
      _
    $region23: #{tpu_custom_call.1} parent=1 // pred_check_branch
      %50 = sbr.rel (0) target = $region25
    $region24: #{tpu_custom_call.1} parent=1 // pred_region
      %51 = dma.done [#allocation6], 128
    $region25: #{tpu_custom_call.1} parent=1 // pred_fallthru
      _
    %v52 = vld [vmem:[#allocation5] sm:$0xff]
    %v53 = vld [vmem:[#allocation5 + $0x8] sm:$0xff]
    %v54 = vld [vmem:[#allocation5 + $0x10] sm:$0xff]
    %v55 = vld [vmem:[#allocation5 + $0x18] sm:$0xff]
    %v56 = vld [vmem:[#allocation5 + $0x20] sm:$0xff]
    %v57 = vld [vmem:[#allocation5 + $0x28] sm:$0xff]
    %v58 = vld [vmem:[#allocation5 + $0x30] sm:$0xff]
    %v59 = vld [vmem:[#allocation5 + $0x38] sm:$0xff]
    %v60 = vld [vmem:[#allocation5 + $0x40] sm:$0xff]
    %v61 = vld [vmem:[#allocation5 + $0x48] sm:$0xff]
    %v62 = vld [vmem:[#allocation5 + $0x50] sm:$0xff]
    %v63 = vld [vmem:[#allocation5 + $0x58] sm:$0xff]
    %v64 = vld [vmem:[#allocation5 + $0x60] sm:$0xff]
    %v65 = vld [vmem:[#allocation5 + $0x68] sm:$0xff]
    %v66 = vld [vmem:[#allocation5 + $0x70] sm:$0xff]
    %v67 = vld [vmem:[#allocation5 + $0x78] sm:$0xff]
    %v68 = vld [vmem:[#allocation5 + $0x80] sm:$0xff]
    %v69 = vld [vmem:[#allocation5 + $0x88] sm:$0xff]
    %v70 = vld [vmem:[#allocation5 + $0x90] sm:$0xff]
    %v71 = vld [vmem:[#allocation5 + $0x98] sm:$0xff]
    %v72 = vld [vmem:[#allocation5 + $0xa0] sm:$0xff]
    %v73 = vld [vmem:[#allocation5 + $0xa8] sm:$0xff]
    %v74 = vld [vmem:[#allocation5 + $0xb0] sm:$0xff]
    %v75 = vld [vmem:[#allocation5 + $0xb8] sm:$0xff]
    %v76 = vld [vmem:[#allocation5 + $0xc0] sm:$0xff]
    %v77 = vld [vmem:[#allocation5 + $0xc8] sm:$0xff]
    %v78 = vld [vmem:[#allocation5 + $0xd0] sm:$0xff]
    %v79 = vld [vmem:[#allocation5 + $0xd8] sm:$0xff]
    %v80 = vld [vmem:[#allocation5 + $0xe0] sm:$0xff]
    %v81 = vld [vmem:[#allocation5 + $0xe8] sm:$0xff]
    %v82 = vld [vmem:[#allocation5 + $0xf0] sm:$0xff]
    %v83 = vld [vmem:[#allocation5 + $0xf8] sm:$0xff]
    %v84 = vld [vmem:[#allocation5 + $0x100] sm:$0xff]
    %v85 = vld [vmem:[#allocation5 + $0x108] sm:$0xff]
    %v86 = vld [vmem:[#allocation5 + $0x110] sm:$0xff]
    %v87 = vld [vmem:[#allocation5 + $0x118] sm:$0xff]
    %v88 = vld [vmem:[#allocation5 + $0x120] sm:$0xff]
    %v89 = vld [vmem:[#allocation5 + $0x128] sm:$0xff]
    %v90 = vld [vmem:[#allocation5 + $0x130] sm:$0xff]
    %v91 = vld [vmem:[#allocation5 + $0x138] sm:$0xff]
    %v92 = vld [vmem:[#allocation5 + $0x140] sm:$0xff]
    %v93 = vld [vmem:[#allocation5 + $0x148] sm:$0xff]
    %v94 = vld [vmem:[#allocation5 + $0x150] sm:$0xff]
    %v95 = vld [vmem:[#allocation5 + $0x158] sm:$0xff]
    %v96 = vld [vmem:[#allocation5 + $0x160] sm:$0xff]
    %v97 = vld [vmem:[#allocation5 + $0x168] sm:$0xff]
    %v98 = vld [vmem:[#allocation5 + $0x170] sm:$0xff]
    %v99 = vld [vmem:[#allocation5 + $0x178] sm:$0xff]
    %v100 = vld [vmem:[#allocation5 + $0x180] sm:$0xff]
    %v101 = vld [vmem:[#allocation5 + $0x188] sm:$0xff]
    %v102 = vld [vmem:[#allocation5 + $0x190] sm:$0xff]
    %v103 = vld [vmem:[#allocation5 + $0x198] sm:$0xff]
    %v104 = vld [vmem:[#allocation5 + $0x1a0] sm:$0xff]
    %v105 = vld [vmem:[#allocation5 + $0x1a8] sm:$0xff]
    %v106 = vld [vmem:[#allocation5 + $0x1b0] sm:$0xff]
    %v107 = vld [vmem:[#allocation5 + $0x1b8] sm:$0xff]
    %v108 = vld [vmem:[#allocation5 + $0x1c0] sm:$0xff]
    %v109 = vld [vmem:[#allocation5 + $0x1c8] sm:$0xff]
    %v110 = vld [vmem:[#allocation5 + $0x1d0] sm:$0xff]
    %v111 = vld [vmem:[#allocation5 + $0x1d8] sm:$0xff]
    %v112 = vld [vmem:[#allocation5 + $0x1e0] sm:$0xff]
    %v113 = vld [vmem:[#allocation5 + $0x1e8] sm:$0xff]
    %v114 = vld [vmem:[#allocation5 + $0x1f0] sm:$0xff]
    %v115 = vld [vmem:[#allocation5 + $0x1f8] sm:$0xff]
    %v116 = vld [vmem:[#allocation5 + $0x200] sm:$0xff]
    %v117 = vld [vmem:[#allocation5 + $0x208] sm:$0xff]
    %v118 = vld [vmem:[#allocation5 + $0x210] sm:$0xff]
    %v119 = vld [vmem:[#allocation5 + $0x218] sm:$0xff]
    %v120 = vld [vmem:[#allocation5 + $0x220] sm:$0xff]
    %v121 = vld [vmem:[#allocation5 + $0x228] sm:$0xff]
    %v122 = vld [vmem:[#allocation5 + $0x230] sm:$0xff]
    %v123 = vld [vmem:[#allocation5 + $0x238] sm:$0xff]
    %v124 = vld [vmem:[#allocation5 + $0x240] sm:$0xff]
    %v125 = vld [vmem:[#allocation5 + $0x248] sm:$0xff]
    %v126 = vld [vmem:[#allocation5 + $0x250] sm:$0xff]
    %v127 = vld [vmem:[#allocation5 + $0x258] sm:$0xff]
    %v128 = vld [vmem:[#allocation5 + $0x260] sm:$0xff]
    %v129 = vld [vmem:[#allocation5 + $0x268] sm:$0xff]
    %v130 = vld [vmem:[#allocation5 + $0x270] sm:$0xff]
    %v131 = vld [vmem:[#allocation5 + $0x278] sm:$0xff]
    %v132 = vld [vmem:[#allocation5 + $0x280] sm:$0xff]
    %v133 = vld [vmem:[#allocation5 + $0x288] sm:$0xff]
    %v134 = vld [vmem:[#allocation5 + $0x290] sm:$0xff]
    %v135 = vld [vmem:[#allocation5 + $0x298] sm:$0xff]
    %v136 = vld [vmem:[#allocation5 + $0x2a0] sm:$0xff]
    %v137 = vld [vmem:[#allocation5 + $0x2a8] sm:$0xff]
    %v138 = vld [vmem:[#allocation5 + $0x2b0] sm:$0xff]
    %v139 = vld [vmem:[#allocation5 + $0x2b8] sm:$0xff]
    %v140 = vld [vmem:[#allocation5 + $0x2c0] sm:$0xff]
    %v141 = vld [vmem:[#allocation5 + $0x2c8] sm:$0xff]
    %v142 = vld [vmem:[#allocation5 + $0x2d0] sm:$0xff]
    %v143 = vld [vmem:[#allocation5 + $0x2d8] sm:$0xff]
    %v144 = vld [vmem:[#allocation5 + $0x2e0] sm:$0xff]
    %v145 = vld [vmem:[#allocation5 + $0x2e8] sm:$0xff]
    %v146 = vld [vmem:[#allocation5 + $0x2f0] sm:$0xff]
    %v147 = vld [vmem:[#allocation5 + $0x2f8] sm:$0xff]
    %v148 = vld [vmem:[#allocation5 + $0x300] sm:$0xff]
    %v149 = vld [vmem:[#allocation5 + $0x308] sm:$0xff]
    %v150 = vld [vmem:[#allocation5 + $0x310] sm:$0xff]
    %v151 = vld [vmem:[#allocation5 + $0x318] sm:$0xff]
    %v152 = vld [vmem:[#allocation5 + $0x320] sm:$0xff]
    %v153 = vld [vmem:[#allocation5 + $0x328] sm:$0xff]
    %v154 = vld [vmem:[#allocation5 + $0x330] sm:$0xff]
    %v155 = vld [vmem:[#allocation5 + $0x338] sm:$0xff]
    %v156 = vld [vmem:[#allocation5 + $0x340] sm:$0xff]
    %v157 = vld [vmem:[#allocation5 + $0x348] sm:$0xff]
    %v158 = vld [vmem:[#allocation5 + $0x350] sm:$0xff]
    %v159 = vld [vmem:[#allocation5 + $0x358] sm:$0xff]
    %v160 = vld [vmem:[#allocation5 + $0x360] sm:$0xff]
    %v161 = vld [vmem:[#allocation5 + $0x368] sm:$0xff]
    %v162 = vld [vmem:[#allocation5 + $0x370] sm:$0xff]
    %v163 = vld [vmem:[#allocation5 + $0x378] sm:$0xff]
    %v164 = vld [vmem:[#allocation5 + $0x380] sm:$0xff]
    %v165 = vld [vmem:[#allocation5 + $0x388] sm:$0xff]
    %v166 = vld [vmem:[#allocation5 + $0x390] sm:$0xff]
    %v167 = vld [vmem:[#allocation5 + $0x398] sm:$0xff]
    %v168 = vld [vmem:[#allocation5 + $0x3a0] sm:$0xff]
    %v169 = vld [vmem:[#allocation5 + $0x3a8] sm:$0xff]
    %v170 = vld [vmem:[#allocation5 + $0x3b0] sm:$0xff]
    %v171 = vld [vmem:[#allocation5 + $0x3b8] sm:$0xff]
    %v172 = vld [vmem:[#allocation5 + $0x3c0] sm:$0xff]
    %v173 = vld [vmem:[#allocation5 + $0x3c8] sm:$0xff]
    %v174 = vld [vmem:[#allocation5 + $0x3d0] sm:$0xff]
    %v175 = vld [vmem:[#allocation5 + $0x3d8] sm:$0xff]
    %v176 = vld [vmem:[#allocation5 + $0x3e0] sm:$0xff]
    %v177 = vld [vmem:[#allocation5 + $0x3e8] sm:$0xff]
    %v178 = vld [vmem:[#allocation5 + $0x3f0] sm:$0xff]
    %v179 = vld [vmem:[#allocation5 + $0x3f8] sm:$0xff]
    %v180 = vld [vmem:[#allocation5 + $0x400] sm:$0xff]
    %v181 = vld [vmem:[#allocation5 + $0x408] sm:$0xff]
    %v182 = vld [vmem:[#allocation5 + $0x410] sm:$0xff]
    %v183 = vld [vmem:[#allocation5 + $0x418] sm:$0xff]
    %v184 = vld [vmem:[#allocation5 + $0x420] sm:$0xff]
    %v185 = vld [vmem:[#allocation5 + $0x428] sm:$0xff]
    %v186 = vld [vmem:[#allocation5 + $0x430] sm:$0xff]
    %v187 = vld [vmem:[#allocation5 + $0x438] sm:$0xff]
    %v188 = vld [vmem:[#allocation5 + $0x440] sm:$0xff]
    %v189 = vld [vmem:[#allocation5 + $0x448] sm:$0xff]
    %v190 = vld [vmem:[#allocation5 + $0x450] sm:$0xff]
    %v191 = vld [vmem:[#allocation5 + $0x458] sm:$0xff]
    %v192 = vld [vmem:[#allocation5 + $0x460] sm:$0xff]
    %v193 = vld [vmem:[#allocation5 + $0x468] sm:$0xff]
    %v194 = vld [vmem:[#allocation5 + $0x470] sm:$0xff]
    %v195 = vld [vmem:[#allocation5 + $0x478] sm:$0xff]
    %v196 = vld [vmem:[#allocation5 + $0x480] sm:$0xff]
    %v197 = vld [vmem:[#allocation5 + $0x488] sm:$0xff]
    %v198 = vld [vmem:[#allocation5 + $0x490] sm:$0xff]
    %v199 = vld [vmem:[#allocation5 + $0x498] sm:$0xff]
    %v200 = vld [vmem:[#allocation5 + $0x4a0] sm:$0xff]
    %v201 = vld [vmem:[#allocation5 + $0x4a8] sm:$0xff]
    %v202 = vld [vmem:[#allocation5 + $0x4b0] sm:$0xff]
    %v203 = vld [vmem:[#allocation5 + $0x4b8] sm:$0xff]
    %v204 = vld [vmem:[#allocation5 + $0x4c0] sm:$0xff]
    %v205 = vld [vmem:[#allocation5 + $0x4c8] sm:$0xff]
    %v206 = vld [vmem:[#allocation5 + $0x4d0] sm:$0xff]
    %v207 = vld [vmem:[#allocation5 + $0x4d8] sm:$0xff]
    %v208 = vld [vmem:[#allocation5 + $0x4e0] sm:$0xff]
    %v209 = vld [vmem:[#allocation5 + $0x4e8] sm:$0xff]
    %v210 = vld [vmem:[#allocation5 + $0x4f0] sm:$0xff]
    %v211 = vld [vmem:[#allocation5 + $0x4f8] sm:$0xff]
    %v212 = vld [vmem:[#allocation5 + $0x500] sm:$0xff]
    %v213 = vld [vmem:[#allocation5 + $0x508] sm:$0xff]
    %v214 = vld [vmem:[#allocation5 + $0x510] sm:$0xff]
    %v215 = vld [vmem:[#allocation5 + $0x518] sm:$0xff]
    %v216 = vld [vmem:[#allocation5 + $0x520] sm:$0xff]
    %v217 = vld [vmem:[#allocation5 + $0x528] sm:$0xff]
    %v218 = vld [vmem:[#allocation5 + $0x530] sm:$0xff]
    %v219 = vld [vmem:[#allocation5 + $0x538] sm:$0xff]
    %v220 = vld [vmem:[#allocation5 + $0x540] sm:$0xff]
    %v221 = vld [vmem:[#allocation5 + $0x548] sm:$0xff]
    %v222 = vld [vmem:[#allocation5 + $0x550] sm:$0xff]
    %v223 = vld [vmem:[#allocation5 + $0x558] sm:$0xff]
    %v224 = vld [vmem:[#allocation5 + $0x560] sm:$0xff]
    %v225 = vld [vmem:[#allocation5 + $0x568] sm:$0xff]
    %v226 = vld [vmem:[#allocation5 + $0x570] sm:$0xff]
    %v227 = vld [vmem:[#allocation5 + $0x578] sm:$0xff]
    %v228 = vld [vmem:[#allocation5 + $0x580] sm:$0xff]
    %v229 = vld [vmem:[#allocation5 + $0x588] sm:$0xff]
    %v230 = vld [vmem:[#allocation5 + $0x590] sm:$0xff]
    %v231 = vld [vmem:[#allocation5 + $0x598] sm:$0xff]
    %v232 = vld [vmem:[#allocation5 + $0x5a0] sm:$0xff]
    %v233 = vld [vmem:[#allocation5 + $0x5a8] sm:$0xff]
    %v234 = vld [vmem:[#allocation5 + $0x5b0] sm:$0xff]
    %v235 = vld [vmem:[#allocation5 + $0x5b8] sm:$0xff]
    %v236 = vld [vmem:[#allocation5 + $0x5c0] sm:$0xff]
    %v237 = vld [vmem:[#allocation5 + $0x5c8] sm:$0xff]
    %v238 = vld [vmem:[#allocation5 + $0x5d0] sm:$0xff]
    %v239 = vld [vmem:[#allocation5 + $0x5d8] sm:$0xff]
    %v240 = vld [vmem:[#allocation5 + $0x5e0] sm:$0xff]
    %v241 = vld [vmem:[#allocation5 + $0x5e8] sm:$0xff]
    %v242 = vld [vmem:[#allocation5 + $0x5f0] sm:$0xff]
    %v243 = vld [vmem:[#allocation5 + $0x5f8] sm:$0xff]
    %v244 = vld [vmem:[#allocation5 + $0x600] sm:$0xff]
    %v245 = vld [vmem:[#allocation5 + $0x608] sm:$0xff]
    %v246 = vld [vmem:[#allocation5 + $0x610] sm:$0xff]
    %v247 = vld [vmem:[#allocation5 + $0x618] sm:$0xff]
    %v248 = vld [vmem:[#allocation5 + $0x620] sm:$0xff]
    %v249 = vld [vmem:[#allocation5 + $0x628] sm:$0xff]
    %v250 = vld [vmem:[#allocation5 + $0x630] sm:$0xff]
    %v251 = vld [vmem:[#allocation5 + $0x638] sm:$0xff]
    %v252 = vld [vmem:[#allocation5 + $0x640] sm:$0xff]
    %v253 = vld [vmem:[#allocation5 + $0x648] sm:$0xff]
    %v254 = vld [vmem:[#allocation5 + $0x650] sm:$0xff]
    %v255 = vld [vmem:[#allocation5 + $0x658] sm:$0xff]
    %v256 = vld [vmem:[#allocation5 + $0x660] sm:$0xff]
    %v257 = vld [vmem:[#allocation5 + $0x668] sm:$0xff]
    %v258 = vld [vmem:[#allocation5 + $0x670] sm:$0xff]
    %v259 = vld [vmem:[#allocation5 + $0x678] sm:$0xff]
    %v260 = vld [vmem:[#allocation5 + $0x680] sm:$0xff]
    %v261 = vld [vmem:[#allocation5 + $0x688] sm:$0xff]
    %v262 = vld [vmem:[#allocation5 + $0x690] sm:$0xff]
    %v263 = vld [vmem:[#allocation5 + $0x698] sm:$0xff]
    %v264 = vld [vmem:[#allocation5 + $0x6a0] sm:$0xff]
    %v265 = vld [vmem:[#allocation5 + $0x6a8] sm:$0xff]
    %v266 = vld [vmem:[#allocation5 + $0x6b0] sm:$0xff]
    %v267 = vld [vmem:[#allocation5 + $0x6b8] sm:$0xff]
    %v268 = vld [vmem:[#allocation5 + $0x6c0] sm:$0xff]
    %v269 = vld [vmem:[#allocation5 + $0x6c8] sm:$0xff]
    %v270 = vld [vmem:[#allocation5 + $0x6d0] sm:$0xff]
    %v271 = vld [vmem:[#allocation5 + $0x6d8] sm:$0xff]
    %v272 = vld [vmem:[#allocation5 + $0x6e0] sm:$0xff]
    %v273 = vld [vmem:[#allocation5 + $0x6e8] sm:$0xff]
    %v274 = vld [vmem:[#allocation5 + $0x6f0] sm:$0xff]
    %v275 = vld [vmem:[#allocation5 + $0x6f8] sm:$0xff]
    %v276 = vld [vmem:[#allocation5 + $0x700] sm:$0xff]
    %v277 = vld [vmem:[#allocation5 + $0x708] sm:$0xff]
    %v278 = vld [vmem:[#allocation5 + $0x710] sm:$0xff]
    %v279 = vld [vmem:[#allocation5 + $0x718] sm:$0xff]
    %v280 = vld [vmem:[#allocation5 + $0x720] sm:$0xff]
    %v281 = vld [vmem:[#allocation5 + $0x728] sm:$0xff]
    %v282 = vld [vmem:[#allocation5 + $0x730] sm:$0xff]
    %v283 = vld [vmem:[#allocation5 + $0x738] sm:$0xff]
    %v284 = vld [vmem:[#allocation5 + $0x740] sm:$0xff]
    %v285 = vld [vmem:[#allocation5 + $0x748] sm:$0xff]
    %v286 = vld [vmem:[#allocation5 + $0x750] sm:$0xff]
    %v287 = vld [vmem:[#allocation5 + $0x758] sm:$0xff]
    %v288 = vld [vmem:[#allocation5 + $0x760] sm:$0xff]
    %v289 = vld [vmem:[#allocation5 + $0x768] sm:$0xff]
    %v290 = vld [vmem:[#allocation5 + $0x770] sm:$0xff]
    %v291 = vld [vmem:[#allocation5 + $0x778] sm:$0xff]
    %v292 = vld [vmem:[#allocation5 + $0x780] sm:$0xff]
    %v293 = vld [vmem:[#allocation5 + $0x788] sm:$0xff]
    %v294 = vld [vmem:[#allocation5 + $0x790] sm:$0xff]
    %v295 = vld [vmem:[#allocation5 + $0x798] sm:$0xff]
    %v296 = vld [vmem:[#allocation5 + $0x7a0] sm:$0xff]
    %v297 = vld [vmem:[#allocation5 + $0x7a8] sm:$0xff]
    %v298 = vld [vmem:[#allocation5 + $0x7b0] sm:$0xff]
    %v299 = vld [vmem:[#allocation5 + $0x7b8] sm:$0xff]
    %v300 = vld [vmem:[#allocation5 + $0x7c0] sm:$0xff]
    %v301 = vld [vmem:[#allocation5 + $0x7c8] sm:$0xff]
    %v302 = vld [vmem:[#allocation5 + $0x7d0] sm:$0xff]
    %v303 = vld [vmem:[#allocation5 + $0x7d8] sm:$0xff]
    %v304 = vld [vmem:[#allocation5 + $0x7e0] sm:$0xff]
    %v305 = vld [vmem:[#allocation5 + $0x7e8] sm:$0xff]
    %v306 = vld [vmem:[#allocation5 + $0x7f0] sm:$0xff]
    %v307 = vld [vmem:[#allocation5 + $0x7f8] sm:$0xff]
    %v308 = vld [vmem:[#allocation5 + $0x800] sm:$0xff]
    %v309 = vld [vmem:[#allocation5 + $0x808] sm:$0xff]
    %v310 = vld [vmem:[#allocation5 + $0x810] sm:$0xff]
    %v311 = vld [vmem:[#allocation5 + $0x818] sm:$0xff]
    %v312 = vld [vmem:[#allocation5 + $0x820] sm:$0xff]
    %v313 = vld [vmem:[#allocation5 + $0x828] sm:$0xff]
    %v314 = vld [vmem:[#allocation5 + $0x830] sm:$0xff]
    %v315 = vld [vmem:[#allocation5 + $0x838] sm:$0xff]
    %v316 = vld [vmem:[#allocation5 + $0x840] sm:$0xff]
    %v317 = vld [vmem:[#allocation5 + $0x848] sm:$0xff]
    %v318 = vld [vmem:[#allocation5 + $0x850] sm:$0xff]
    %v319 = vld [vmem:[#allocation5 + $0x858] sm:$0xff]
    %v320 = vld [vmem:[#allocation5 + $0x860] sm:$0xff]
    %v321 = vld [vmem:[#allocation5 + $0x868] sm:$0xff]
    %v322 = vld [vmem:[#allocation5 + $0x870] sm:$0xff]
    %v323 = vld [vmem:[#allocation5 + $0x878] sm:$0xff]
    %v324 = vld [vmem:[#allocation5 + $0x880] sm:$0xff]
    %v325 = vld [vmem:[#allocation5 + $0x888] sm:$0xff]
    %v326 = vld [vmem:[#allocation5 + $0x890] sm:$0xff]
    %v327 = vld [vmem:[#allocation5 + $0x898] sm:$0xff]
    %v328 = vld [vmem:[#allocation5 + $0x8a0] sm:$0xff]
    %v329 = vld [vmem:[#allocation5 + $0x8a8] sm:$0xff]
    %v330 = vld [vmem:[#allocation5 + $0x8b0] sm:$0xff]
    %v331 = vld [vmem:[#allocation5 + $0x8b8] sm:$0xff]
    %v332 = vld [vmem:[#allocation5 + $0x8c0] sm:$0xff]
    %v333 = vld [vmem:[#allocation5 + $0x8c8] sm:$0xff]
    %v334 = vld [vmem:[#allocation5 + $0x8d0] sm:$0xff]
    %v335 = vld [vmem:[#allocation5 + $0x8d8] sm:$0xff]
    %v336 = vld [vmem:[#allocation5 + $0x8e0] sm:$0xff]
    %v337 = vld [vmem:[#allocation5 + $0x8e8] sm:$0xff]
    %v338 = vld [vmem:[#allocation5 + $0x8f0] sm:$0xff]
    %v339 = vld [vmem:[#allocation5 + $0x8f8] sm:$0xff]
    %v340 = vld [vmem:[#allocation5 + $0x900] sm:$0xff]
    %v341 = vld [vmem:[#allocation5 + $0x908] sm:$0xff]
    %v342 = vld [vmem:[#allocation5 + $0x910] sm:$0xff]
    %v343 = vld [vmem:[#allocation5 + $0x918] sm:$0xff]
    %v344 = vld [vmem:[#allocation5 + $0x920] sm:$0xff]
    %v345 = vld [vmem:[#allocation5 + $0x928] sm:$0xff]
    %v346 = vld [vmem:[#allocation5 + $0x930] sm:$0xff]
    %v347 = vld [vmem:[#allocation5 + $0x938] sm:$0xff]
    %v348 = vld [vmem:[#allocation5 + $0x940] sm:$0xff]
    %v349 = vld [vmem:[#allocation5 + $0x948] sm:$0xff]
    %v350 = vld [vmem:[#allocation5 + $0x950] sm:$0xff]
    %v351 = vld [vmem:[#allocation5 + $0x958] sm:$0xff]
    %v352 = vld [vmem:[#allocation5 + $0x960] sm:$0xff]
    %v353 = vld [vmem:[#allocation5 + $0x968] sm:$0xff]
    %v354 = vld [vmem:[#allocation5 + $0x970] sm:$0xff]
    %v355 = vld [vmem:[#allocation5 + $0x978] sm:$0xff]
    %v356 = vld [vmem:[#allocation5 + $0x980] sm:$0xff]
    %v357 = vld [vmem:[#allocation5 + $0x988] sm:$0xff]
    %v358 = vld [vmem:[#allocation5 + $0x990] sm:$0xff]
    %v359 = vld [vmem:[#allocation5 + $0x998] sm:$0xff]
    %v360 = vld [vmem:[#allocation5 + $0x9a0] sm:$0xff]
    %v361 = vld [vmem:[#allocation5 + $0x9a8] sm:$0xff]
    %v362 = vld [vmem:[#allocation5 + $0x9b0] sm:$0xff]
    %v363 = vld [vmem:[#allocation5 + $0x9b8] sm:$0xff]
    %v364 = vld [vmem:[#allocation5 + $0x9c0] sm:$0xff]
    %v365 = vld [vmem:[#allocation5 + $0x9c8] sm:$0xff]
    %v366 = vld [vmem:[#allocation5 + $0x9d0] sm:$0xff]
    %v367 = vld [vmem:[#allocation5 + $0x9d8] sm:$0xff]
    %v368 = vld [vmem:[#allocation5 + $0x9e0] sm:$0xff]
    %v369 = vld [vmem:[#allocation5 + $0x9e8] sm:$0xff]
    %v370 = vld [vmem:[#allocation5 + $0x9f0] sm:$0xff]
    %v371 = vld [vmem:[#allocation5 + $0x9f8] sm:$0xff]
    %v372 = vld [vmem:[#allocation5 + $0xa00] sm:$0xff]
    %v373 = vld [vmem:[#allocation5 + $0xa08] sm:$0xff]
    %v374 = vld [vmem:[#allocation5 + $0xa10] sm:$0xff]
    %v375 = vld [vmem:[#allocation5 + $0xa18] sm:$0xff]
    %v376 = vld [vmem:[#allocation5 + $0xa20] sm:$0xff]
    %v377 = vld [vmem:[#allocation5 + $0xa28] sm:$0xff]
    %v378 = vld [vmem:[#allocation5 + $0xa30] sm:$0xff]
    %v379 = vld [vmem:[#allocation5 + $0xa38] sm:$0xff]
    %v380 = vld [vmem:[#allocation5 + $0xa40] sm:$0xff]
    %v381 = vld [vmem:[#allocation5 + $0xa48] sm:$0xff]
    %v382 = vld [vmem:[#allocation5 + $0xa50] sm:$0xff]
    %v383 = vld [vmem:[#allocation5 + $0xa58] sm:$0xff]
    %v384 = vld [vmem:[#allocation5 + $0xa60] sm:$0xff]
    %v385 = vld [vmem:[#allocation5 + $0xa68] sm:$0xff]
    %v386 = vld [vmem:[#allocation5 + $0xa70] sm:$0xff]
    %v387 = vld [vmem:[#allocation5 + $0xa78] sm:$0xff]
    %v388 = vld [vmem:[#allocation5 + $0xa80] sm:$0xff]
    %v389 = vld [vmem:[#allocation5 + $0xa88] sm:$0xff]
    %v390 = vld [vmem:[#allocation5 + $0xa90] sm:$0xff]
    %v391 = vld [vmem:[#allocation5 + $0xa98] sm:$0xff]
    %v392 = vld [vmem:[#allocation5 + $0xaa0] sm:$0xff]
    %v393 = vld [vmem:[#allocation5 + $0xaa8] sm:$0xff]
    %v394 = vld [vmem:[#allocation5 + $0xab0] sm:$0xff]
    %v395 = vld [vmem:[#allocation5 + $0xab8] sm:$0xff]
    %v396 = vld [vmem:[#allocation5 + $0xac0] sm:$0xff]
    %v397 = vld [vmem:[#allocation5 + $0xac8] sm:$0xff]
    %v398 = vld [vmem:[#allocation5 + $0xad0] sm:$0xff]
    %v399 = vld [vmem:[#allocation5 + $0xad8] sm:$0xff]
    %v400 = vld [vmem:[#allocation5 + $0xae0] sm:$0xff]
    %v401 = vld [vmem:[#allocation5 + $0xae8] sm:$0xff]
    %v402 = vld [vmem:[#allocation5 + $0xaf0] sm:$0xff]
    %v403 = vld [vmem:[#allocation5 + $0xaf8] sm:$0xff]
    %v404 = vld [vmem:[#allocation5 + $0xb00] sm:$0xff]
    %v405 = vld [vmem:[#allocation5 + $0xb08] sm:$0xff]
    %v406 = vld [vmem:[#allocation5 + $0xb10] sm:$0xff]
    %v407 = vld [vmem:[#allocation5 + $0xb18] sm:$0xff]
    %v408 = vld [vmem:[#allocation5 + $0xb20] sm:$0xff]
    %v409 = vld [vmem:[#allocation5 + $0xb28] sm:$0xff]
    %v410 = vld [vmem:[#allocation5 + $0xb30] sm:$0xff]
    %v411 = vld [vmem:[#allocation5 + $0xb38] sm:$0xff]
    %v412 = vld [vmem:[#allocation5 + $0xb40] sm:$0xff]
    %v413 = vld [vmem:[#allocation5 + $0xb48] sm:$0xff]
    %v414 = vld [vmem:[#allocation5 + $0xb50] sm:$0xff]
    %v415 = vld [vmem:[#allocation5 + $0xb58] sm:$0xff]
    %v416 = vld [vmem:[#allocation5 + $0xb60] sm:$0xff]
    %v417 = vld [vmem:[#allocation5 + $0xb68] sm:$0xff]
    %v418 = vld [vmem:[#allocation5 + $0xb70] sm:$0xff]
    %v419 = vld [vmem:[#allocation5 + $0xb78] sm:$0xff]
    %v420 = vld [vmem:[#allocation5 + $0xb80] sm:$0xff]
    %v421 = vld [vmem:[#allocation5 + $0xb88] sm:$0xff]
    %v422 = vld [vmem:[#allocation5 + $0xb90] sm:$0xff]
    %v423 = vld [vmem:[#allocation5 + $0xb98] sm:$0xff]
    %v424 = vld [vmem:[#allocation5 + $0xba0] sm:$0xff]
    %v425 = vld [vmem:[#allocation5 + $0xba8] sm:$0xff]
    %v426 = vld [vmem:[#allocation5 + $0xbb0] sm:$0xff]
    %v427 = vld [vmem:[#allocation5 + $0xbb8] sm:$0xff]
    %v428 = vld [vmem:[#allocation5 + $0xbc0] sm:$0xff]
    %v429 = vld [vmem:[#allocation5 + $0xbc8] sm:$0xff]
    %v430 = vld [vmem:[#allocation5 + $0xbd0] sm:$0xff]
    %v431 = vld [vmem:[#allocation5 + $0xbd8] sm:$0xff]
    %v432 = vld [vmem:[#allocation5 + $0xbe0] sm:$0xff]
    %v433 = vld [vmem:[#allocation5 + $0xbe8] sm:$0xff]
    %v434 = vld [vmem:[#allocation5 + $0xbf0] sm:$0xff]
    %v435 = vld [vmem:[#allocation5 + $0xbf8] sm:$0xff]
    %v436 = vld [vmem:[#allocation5 + $0xc00] sm:$0xff]
    %v437 = vld [vmem:[#allocation5 + $0xc08] sm:$0xff]
    %v438 = vld [vmem:[#allocation5 + $0xc10] sm:$0xff]
    %v439 = vld [vmem:[#allocation5 + $0xc18] sm:$0xff]
    %v440 = vld [vmem:[#allocation5 + $0xc20] sm:$0xff]
    %v441 = vld [vmem:[#allocation5 + $0xc28] sm:$0xff]
    %v442 = vld [vmem:[#allocation5 + $0xc30] sm:$0xff]
    %v443 = vld [vmem:[#allocation5 + $0xc38] sm:$0xff]
    %v444 = vld [vmem:[#allocation5 + $0xc40] sm:$0xff]
    %v445 = vld [vmem:[#allocation5 + $0xc48] sm:$0xff]
    %v446 = vld [vmem:[#allocation5 + $0xc50] sm:$0xff]
    %v447 = vld [vmem:[#allocation5 + $0xc58] sm:$0xff]
    %v448 = vld [vmem:[#allocation5 + $0xc60] sm:$0xff]
    %v449 = vld [vmem:[#allocation5 + $0xc68] sm:$0xff]
    %v450 = vld [vmem:[#allocation5 + $0xc70] sm:$0xff]
    %v451 = vld [vmem:[#allocation5 + $0xc78] sm:$0xff]
    %v452 = vld [vmem:[#allocation5 + $0xc80] sm:$0xff]
    %v453 = vld [vmem:[#allocation5 + $0xc88] sm:$0xff]
    %v454 = vld [vmem:[#allocation5 + $0xc90] sm:$0xff]
    %v455 = vld [vmem:[#allocation5 + $0xc98] sm:$0xff]
    %v456 = vld [vmem:[#allocation5 + $0xca0] sm:$0xff]
    %v457 = vld [vmem:[#allocation5 + $0xca8] sm:$0xff]
    %v458 = vld [vmem:[#allocation5 + $0xcb0] sm:$0xff]
    %v459 = vld [vmem:[#allocation5 + $0xcb8] sm:$0xff]
    %v460 = vld [vmem:[#allocation5 + $0xcc0] sm:$0xff]
    %v461 = vld [vmem:[#allocation5 + $0xcc8] sm:$0xff]
    %v462 = vld [vmem:[#allocation5 + $0xcd0] sm:$0xff]
    %v463 = vld [vmem:[#allocation5 + $0xcd8] sm:$0xff]
    %v464 = vld [vmem:[#allocation5 + $0xce0] sm:$0xff]
    %v465 = vld [vmem:[#allocation5 + $0xce8] sm:$0xff]
    %v466 = vld [vmem:[#allocation5 + $0xcf0] sm:$0xff]
    %v467 = vld [vmem:[#allocation5 + $0xcf8] sm:$0xff]
    %v468 = vld [vmem:[#allocation5 + $0xd00] sm:$0xff]
    %v469 = vld [vmem:[#allocation5 + $0xd08] sm:$0xff]
    %v470 = vld [vmem:[#allocation5 + $0xd10] sm:$0xff]
    %v471 = vld [vmem:[#allocation5 + $0xd18] sm:$0xff]
    %v472 = vld [vmem:[#allocation5 + $0xd20] sm:$0xff]
    %v473 = vld [vmem:[#allocation5 + $0xd28] sm:$0xff]
    %v474 = vld [vmem:[#allocation5 + $0xd30] sm:$0xff]
    %v475 = vld [vmem:[#allocation5 + $0xd38] sm:$0xff]
    %v476 = vld [vmem:[#allocation5 + $0xd40] sm:$0xff]
    %v477 = vld [vmem:[#allocation5 + $0xd48] sm:$0xff]
    %v478 = vld [vmem:[#allocation5 + $0xd50] sm:$0xff]
    %v479 = vld [vmem:[#allocation5 + $0xd58] sm:$0xff]
    %v480 = vld [vmem:[#allocation5 + $0xd60] sm:$0xff]
    %v481 = vld [vmem:[#allocation5 + $0xd68] sm:$0xff]
    %v482 = vld [vmem:[#allocation5 + $0xd70] sm:$0xff]
    %v483 = vld [vmem:[#allocation5 + $0xd78] sm:$0xff]
    %v484 = vld [vmem:[#allocation5 + $0xd80] sm:$0xff]
    %v485 = vld [vmem:[#allocation5 + $0xd88] sm:$0xff]
    %v486 = vld [vmem:[#allocation5 + $0xd90] sm:$0xff]
    %v487 = vld [vmem:[#allocation5 + $0xd98] sm:$0xff]
    %v488 = vld [vmem:[#allocation5 + $0xda0] sm:$0xff]
    %v489 = vld [vmem:[#allocation5 + $0xda8] sm:$0xff]
    %v490 = vld [vmem:[#allocation5 + $0xdb0] sm:$0xff]
    %v491 = vld [vmem:[#allocation5 + $0xdb8] sm:$0xff]
    %v492 = vld [vmem:[#allocation5 + $0xdc0] sm:$0xff]
    %v493 = vld [vmem:[#allocation5 + $0xdc8] sm:$0xff]
    %v494 = vld [vmem:[#allocation5 + $0xdd0] sm:$0xff]
    %v495 = vld [vmem:[#allocation5 + $0xdd8] sm:$0xff]
    %v496 = vld [vmem:[#allocation5 + $0xde0] sm:$0xff]
    %v497 = vld [vmem:[#allocation5 + $0xde8] sm:$0xff]
    %v498 = vld [vmem:[#allocation5 + $0xdf0] sm:$0xff]
    %v499 = vld [vmem:[#allocation5 + $0xdf8] sm:$0xff]
    %v500 = vld [vmem:[#allocation5 + $0xe00] sm:$0xff]
    %v501 = vld [vmem:[#allocation5 + $0xe08] sm:$0xff]
    %v502 = vld [vmem:[#allocation5 + $0xe10] sm:$0xff]
    %v503 = vld [vmem:[#allocation5 + $0xe18] sm:$0xff]
    %v504 = vld [vmem:[#allocation5 + $0xe20] sm:$0xff]
    %v505 = vld [vmem:[#allocation5 + $0xe28] sm:$0xff]
    %v506 = vld [vmem:[#allocation5 + $0xe30] sm:$0xff]
    %v507 = vld [vmem:[#allocation5 + $0xe38] sm:$0xff]
    %v508 = vld [vmem:[#allocation5 + $0xe40] sm:$0xff]
    %v509 = vld [vmem:[#allocation5 + $0xe48] sm:$0xff]
    %v510 = vld [vmem:[#allocation5 + $0xe50] sm:$0xff]
    %v511 = vld [vmem:[#allocation5 + $0xe58] sm:$0xff]
    %v512 = vld [vmem:[#allocation5 + $0xe60] sm:$0xff]
    %v513 = vld [vmem:[#allocation5 + $0xe68] sm:$0xff]
    %v514 = vld [vmem:[#allocation5 + $0xe70] sm:$0xff]
    %v515 = vld [vmem:[#allocation5 + $0xe78] sm:$0xff]
    %v516 = vld [vmem:[#allocation5 + $0xe80] sm:$0xff]
    %v517 = vld [vmem:[#allocation5 + $0xe88] sm:$0xff]
    %v518 = vld [vmem:[#allocation5 + $0xe90] sm:$0xff]
    %v519 = vld [vmem:[#allocation5 + $0xe98] sm:$0xff]
    %v520 = vld [vmem:[#allocation5 + $0xea0] sm:$0xff]
    %v521 = vld [vmem:[#allocation5 + $0xea8] sm:$0xff]
    %v522 = vld [vmem:[#allocation5 + $0xeb0] sm:$0xff]
    %v523 = vld [vmem:[#allocation5 + $0xeb8] sm:$0xff]
    %v524 = vld [vmem:[#allocation5 + $0xec0] sm:$0xff]
    %v525 = vld [vmem:[#allocation5 + $0xec8] sm:$0xff]
    %v526 = vld [vmem:[#allocation5 + $0xed0] sm:$0xff]
    %v527 = vld [vmem:[#allocation5 + $0xed8] sm:$0xff]
    %v528 = vld [vmem:[#allocation5 + $0xee0] sm:$0xff]
    %v529 = vld [vmem:[#allocation5 + $0xee8] sm:$0xff]
    %v530 = vld [vmem:[#allocation5 + $0xef0] sm:$0xff]
    %v531 = vld [vmem:[#allocation5 + $0xef8] sm:$0xff]
    %v532 = vld [vmem:[#allocation5 + $0xf00] sm:$0xff]
    %v533 = vld [vmem:[#allocation5 + $0xf08] sm:$0xff]
    %v534 = vld [vmem:[#allocation5 + $0xf10] sm:$0xff]
    %v535 = vld [vmem:[#allocation5 + $0xf18] sm:$0xff]
    %v536 = vld [vmem:[#allocation5 + $0xf20] sm:$0xff]
    %v537 = vld [vmem:[#allocation5 + $0xf28] sm:$0xff]
    %v538 = vld [vmem:[#allocation5 + $0xf30] sm:$0xff]
    %v539 = vld [vmem:[#allocation5 + $0xf38] sm:$0xff]
    %v540 = vld [vmem:[#allocation5 + $0xf40] sm:$0xff]
    %v541 = vld [vmem:[#allocation5 + $0xf48] sm:$0xff]
    %v542 = vld [vmem:[#allocation5 + $0xf50] sm:$0xff]
    %v543 = vld [vmem:[#allocation5 + $0xf58] sm:$0xff]
    %v544 = vld [vmem:[#allocation5 + $0xf60] sm:$0xff]
    %v545 = vld [vmem:[#allocation5 + $0xf68] sm:$0xff]
    %v546 = vld [vmem:[#allocation5 + $0xf70] sm:$0xff]
    %v547 = vld [vmem:[#allocation5 + $0xf78] sm:$0xff]
    %v548 = vld [vmem:[#allocation5 + $0xf80] sm:$0xff]
    %v549 = vld [vmem:[#allocation5 + $0xf88] sm:$0xff]
    %v550 = vld [vmem:[#allocation5 + $0xf90] sm:$0xff]
    %v551 = vld [vmem:[#allocation5 + $0xf98] sm:$0xff]
    %v552 = vld [vmem:[#allocation5 + $0xfa0] sm:$0xff]
    %v553 = vld [vmem:[#allocation5 + $0xfa8] sm:$0xff]
    %v554 = vld [vmem:[#allocation5 + $0xfb0] sm:$0xff]
    %v555 = vld [vmem:[#allocation5 + $0xfb8] sm:$0xff]
    %v556 = vld [vmem:[#allocation5 + $0xfc0] sm:$0xff]
    %v557 = vld [vmem:[#allocation5 + $0xfc8] sm:$0xff]
    %v558 = vld [vmem:[#allocation5 + $0xfd0] sm:$0xff]
    %v559 = vld [vmem:[#allocation5 + $0xfd8] sm:$0xff]
    %v560 = vld [vmem:[#allocation5 + $0xfe0] sm:$0xff]
    %v561 = vld [vmem:[#allocation5 + $0xfe8] sm:$0xff]
    %v562 = vld [vmem:[#allocation5 + $0xff0] sm:$0xff]
    %v563 = vld [vmem:[#allocation5 + $0xff8] sm:$0xff]
    %v564 = vunpack.c.l.bf16 %v52
    %v565 = vunpack.c.h.bf16 %v52
    %v566 = vunpack.c.l.bf16 %v53
    %v567 = vunpack.c.h.bf16 %v53
    %v568 = vunpack.c.l.bf16 %v54
    %v569 = vunpack.c.h.bf16 %v54
    %v570 = vunpack.c.l.bf16 %v55
    %v571 = vunpack.c.h.bf16 %v55
    %v572 = vunpack.c.l.bf16 %v56
    %v573 = vunpack.c.h.bf16 %v56
    %v574 = vunpack.c.l.bf16 %v57
    %v575 = vunpack.c.h.bf16 %v57
    %v576 = vunpack.c.l.bf16 %v58
    %v577 = vunpack.c.h.bf16 %v58
    %v578 = vunpack.c.l.bf16 %v59
    %v579 = vunpack.c.h.bf16 %v59
    %v580 = vunpack.c.l.bf16 %v60
    %v581 = vunpack.c.h.bf16 %v60
    %v582 = vunpack.c.l.bf16 %v61
    %v583 = vunpack.c.h.bf16 %v61
    %v584 = vunpack.c.l.bf16 %v62
    %v585 = vunpack.c.h.bf16 %v62
    %v586 = vunpack.c.l.bf16 %v63
    %v587 = vunpack.c.h.bf16 %v63
    %v588 = vunpack.c.l.bf16 %v64
    %v589 = vunpack.c.h.bf16 %v64
    %v590 = vunpack.c.l.bf16 %v65
    %v591 = vunpack.c.h.bf16 %v65
    %v592 = vunpack.c.l.bf16 %v66
    %v593 = vunpack.c.h.bf16 %v66
    %v594 = vunpack.c.l.bf16 %v67
    %v595 = vunpack.c.h.bf16 %v67
    %v596 = vunpack.c.l.bf16 %v68
    %v597 = vunpack.c.h.bf16 %v68
    %v598 = vunpack.c.l.bf16 %v69
    %v599 = vunpack.c.h.bf16 %v69
    %v600 = vunpack.c.l.bf16 %v70
    %v601 = vunpack.c.h.bf16 %v70
    %v602 = vunpack.c.l.bf16 %v71
    %v603 = vunpack.c.h.bf16 %v71
    %v604 = vunpack.c.l.bf16 %v72
    %v605 = vunpack.c.h.bf16 %v72
    %v606 = vunpack.c.l.bf16 %v73
    %v607 = vunpack.c.h.bf16 %v73
    %v608 = vunpack.c.l.bf16 %v74
    %v609 = vunpack.c.h.bf16 %v74
    %v610 = vunpack.c.l.bf16 %v75
    %v611 = vunpack.c.h.bf16 %v75
    %v612 = vunpack.c.l.bf16 %v76
    %v613 = vunpack.c.h.bf16 %v76
    %v614 = vunpack.c.l.bf16 %v77
    %v615 = vunpack.c.h.bf16 %v77
    %v616 = vunpack.c.l.bf16 %v78
    %v617 = vunpack.c.h.bf16 %v78
    %v618 = vunpack.c.l.bf16 %v79
    %v619 = vunpack.c.h.bf16 %v79
    %v620 = vunpack.c.l.bf16 %v80
    %v621 = vunpack.c.h.bf16 %v80
    %v622 = vunpack.c.l.bf16 %v81
    %v623 = vunpack.c.h.bf16 %v81
    %v624 = vunpack.c.l.bf16 %v82
    %v625 = vunpack.c.h.bf16 %v82
    %v626 = vunpack.c.l.bf16 %v83
    %v627 = vunpack.c.h.bf16 %v83
    %v628 = vunpack.c.l.bf16 %v84
    %v629 = vunpack.c.h.bf16 %v84
    %v630 = vunpack.c.l.bf16 %v85
    %v631 = vunpack.c.h.bf16 %v85
    %v632 = vunpack.c.l.bf16 %v86
    %v633 = vunpack.c.h.bf16 %v86
    %v634 = vunpack.c.l.bf16 %v87
    %v635 = vunpack.c.h.bf16 %v87
    %v636 = vunpack.c.l.bf16 %v88
    %v637 = vunpack.c.h.bf16 %v88
    %v638 = vunpack.c.l.bf16 %v89
    %v639 = vunpack.c.h.bf16 %v89
    %v640 = vunpack.c.l.bf16 %v90
    %v641 = vunpack.c.h.bf16 %v90
    %v642 = vunpack.c.l.bf16 %v91
    %v643 = vunpack.c.h.bf16 %v91
    %v644 = vunpack.c.l.bf16 %v92
    %v645 = vunpack.c.h.bf16 %v92
    %v646 = vunpack.c.l.bf16 %v93
    %v647 = vunpack.c.h.bf16 %v93
    %v648 = vunpack.c.l.bf16 %v94
    %v649 = vunpack.c.h.bf16 %v94
    %v650 = vunpack.c.l.bf16 %v95
    %v651 = vunpack.c.h.bf16 %v95
    %v652 = vunpack.c.l.bf16 %v96
    %v653 = vunpack.c.h.bf16 %v96
    %v654 = vunpack.c.l.bf16 %v97
    %v655 = vunpack.c.h.bf16 %v97
    %v656 = vunpack.c.l.bf16 %v98
    %v657 = vunpack.c.h.bf16 %v98
    %v658 = vunpack.c.l.bf16 %v99
    %v659 = vunpack.c.h.bf16 %v99
    %v660 = vunpack.c.l.bf16 %v100
    %v661 = vunpack.c.h.bf16 %v100
    %v662 = vunpack.c.l.bf16 %v101
    %v663 = vunpack.c.h.bf16 %v101
    %v664 = vunpack.c.l.bf16 %v102
    %v665 = vunpack.c.h.bf16 %v102
    %v666 = vunpack.c.l.bf16 %v103
    %v667 = vunpack.c.h.bf16 %v103
    %v668 = vunpack.c.l.bf16 %v104
    %v669 = vunpack.c.h.bf16 %v104
    %v670 = vunpack.c.l.bf16 %v105
    %v671 = vunpack.c.h.bf16 %v105
    %v672 = vunpack.c.l.bf16 %v106
    %v673 = vunpack.c.h.bf16 %v106
    %v674 = vunpack.c.l.bf16 %v107
    %v675 = vunpack.c.h.bf16 %v107
    %v676 = vunpack.c.l.bf16 %v108
    %v677 = vunpack.c.h.bf16 %v108
    %v678 = vunpack.c.l.bf16 %v109
    %v679 = vunpack.c.h.bf16 %v109
    %v680 = vunpack.c.l.bf16 %v110
    %v681 = vunpack.c.h.bf16 %v110
    %v682 = vunpack.c.l.bf16 %v111
    %v683 = vunpack.c.h.bf16 %v111
    %v684 = vunpack.c.l.bf16 %v112
    %v685 = vunpack.c.h.bf16 %v112
    %v686 = vunpack.c.l.bf16 %v113
    %v687 = vunpack.c.h.bf16 %v113
    %v688 = vunpack.c.l.bf16 %v114
    %v689 = vunpack.c.h.bf16 %v114
    %v690 = vunpack.c.l.bf16 %v115
    %v691 = vunpack.c.h.bf16 %v115
    %v692 = vunpack.c.l.bf16 %v116
    %v693 = vunpack.c.h.bf16 %v116
    %v694 = vunpack.c.l.bf16 %v117
    %v695 = vunpack.c.h.bf16 %v117
    %v696 = vunpack.c.l.bf16 %v118
    %v697 = vunpack.c.h.bf16 %v118
    %v698 = vunpack.c.l.bf16 %v119
    %v699 = vunpack.c.h.bf16 %v119
    %v700 = vunpack.c.l.bf16 %v120
    %v701 = vunpack.c.h.bf16 %v120
    %v702 = vunpack.c.l.bf16 %v121
    %v703 = vunpack.c.h.bf16 %v121
    %v704 = vunpack.c.l.bf16 %v122
    %v705 = vunpack.c.h.bf16 %v122
    %v706 = vunpack.c.l.bf16 %v123
    %v707 = vunpack.c.h.bf16 %v123
    %v708 = vunpack.c.l.bf16 %v124
    %v709 = vunpack.c.h.bf16 %v124
    %v710 = vunpack.c.l.bf16 %v125
    %v711 = vunpack.c.h.bf16 %v125
    %v712 = vunpack.c.l.bf16 %v126
    %v713 = vunpack.c.h.bf16 %v126
    %v714 = vunpack.c.l.bf16 %v127
    %v715 = vunpack.c.h.bf16 %v127
    %v716 = vunpack.c.l.bf16 %v128
    %v717 = vunpack.c.h.bf16 %v128
    %v718 = vunpack.c.l.bf16 %v129
    %v719 = vunpack.c.h.bf16 %v129
    %v720 = vunpack.c.l.bf16 %v130
    %v721 = vunpack.c.h.bf16 %v130
    %v722 = vunpack.c.l.bf16 %v131
    %v723 = vunpack.c.h.bf16 %v131
    %v724 = vunpack.c.l.bf16 %v132
    %v725 = vunpack.c.h.bf16 %v132
    %v726 = vunpack.c.l.bf16 %v133
    %v727 = vunpack.c.h.bf16 %v133
    %v728 = vunpack.c.l.bf16 %v134
    %v729 = vunpack.c.h.bf16 %v134
    %v730 = vunpack.c.l.bf16 %v135
    %v731 = vunpack.c.h.bf16 %v135
    %v732 = vunpack.c.l.bf16 %v136
    %v733 = vunpack.c.h.bf16 %v136
    %v734 = vunpack.c.l.bf16 %v137
    %v735 = vunpack.c.h.bf16 %v137
    %v736 = vunpack.c.l.bf16 %v138
    %v737 = vunpack.c.h.bf16 %v138
    %v738 = vunpack.c.l.bf16 %v139
    %v739 = vunpack.c.h.bf16 %v139
    %v740 = vunpack.c.l.bf16 %v140
    %v741 = vunpack.c.h.bf16 %v140
    %v742 = vunpack.c.l.bf16 %v141
    %v743 = vunpack.c.h.bf16 %v141
    %v744 = vunpack.c.l.bf16 %v142
    %v745 = vunpack.c.h.bf16 %v142
    %v746 = vunpack.c.l.bf16 %v143
    %v747 = vunpack.c.h.bf16 %v143
    %v748 = vunpack.c.l.bf16 %v144
    %v749 = vunpack.c.h.bf16 %v144
    %v750 = vunpack.c.l.bf16 %v145
    %v751 = vunpack.c.h.bf16 %v145
    %v752 = vunpack.c.l.bf16 %v146
    %v753 = vunpack.c.h.bf16 %v146
    %v754 = vunpack.c.l.bf16 %v147
    %v755 = vunpack.c.h.bf16 %v147
    %v756 = vunpack.c.l.bf16 %v148
    %v757 = vunpack.c.h.bf16 %v148
    %v758 = vunpack.c.l.bf16 %v149
    %v759 = vunpack.c.h.bf16 %v149
    %v760 = vunpack.c.l.bf16 %v150
    %v761 = vunpack.c.h.bf16 %v150
    %v762 = vunpack.c.l.bf16 %v151
    %v763 = vunpack.c.h.bf16 %v151
    %v764 = vunpack.c.l.bf16 %v152
    %v765 = vunpack.c.h.bf16 %v152
    %v766 = vunpack.c.l.bf16 %v153
    %v767 = vunpack.c.h.bf16 %v153
    %v768 = vunpack.c.l.bf16 %v154
    %v769 = vunpack.c.h.bf16 %v154
    %v770 = vunpack.c.l.bf16 %v155
    %v771 = vunpack.c.h.bf16 %v155
    %v772 = vunpack.c.l.bf16 %v156
    %v773 = vunpack.c.h.bf16 %v156
    %v774 = vunpack.c.l.bf16 %v157
    %v775 = vunpack.c.h.bf16 %v157
    %v776 = vunpack.c.l.bf16 %v158
    %v777 = vunpack.c.h.bf16 %v158
    %v778 = vunpack.c.l.bf16 %v159
    %v779 = vunpack.c.h.bf16 %v159
    %v780 = vunpack.c.l.bf16 %v160
    %v781 = vunpack.c.h.bf16 %v160
    %v782 = vunpack.c.l.bf16 %v161
    %v783 = vunpack.c.h.bf16 %v161
    %v784 = vunpack.c.l.bf16 %v162
    %v785 = vunpack.c.h.bf16 %v162
    %v786 = vunpack.c.l.bf16 %v163
    %v787 = vunpack.c.h.bf16 %v163
    %v788 = vunpack.c.l.bf16 %v164
    %v789 = vunpack.c.h.bf16 %v164
    %v790 = vunpack.c.l.bf16 %v165
    %v791 = vunpack.c.h.bf16 %v165
    %v792 = vunpack.c.l.bf16 %v166
    %v793 = vunpack.c.h.bf16 %v166
    %v794 = vunpack.c.l.bf16 %v167
    %v795 = vunpack.c.h.bf16 %v167
    %v796 = vunpack.c.l.bf16 %v168
    %v797 = vunpack.c.h.bf16 %v168
    %v798 = vunpack.c.l.bf16 %v169
    %v799 = vunpack.c.h.bf16 %v169
    %v800 = vunpack.c.l.bf16 %v170
    %v801 = vunpack.c.h.bf16 %v170
    %v802 = vunpack.c.l.bf16 %v171
    %v803 = vunpack.c.h.bf16 %v171
    %v804 = vunpack.c.l.bf16 %v172
    %v805 = vunpack.c.h.bf16 %v172
    %v806 = vunpack.c.l.bf16 %v173
    %v807 = vunpack.c.h.bf16 %v173
    %v808 = vunpack.c.l.bf16 %v174
    %v809 = vunpack.c.h.bf16 %v174
    %v810 = vunpack.c.l.bf16 %v175
    %v811 = vunpack.c.h.bf16 %v175
    %v812 = vunpack.c.l.bf16 %v176
    %v813 = vunpack.c.h.bf16 %v176
    %v814 = vunpack.c.l.bf16 %v177
    %v815 = vunpack.c.h.bf16 %v177
    %v816 = vunpack.c.l.bf16 %v178
    %v817 = vunpack.c.h.bf16 %v178
    %v818 = vunpack.c.l.bf16 %v179
    %v819 = vunpack.c.h.bf16 %v179
    %v820 = vunpack.c.l.bf16 %v180
    %v821 = vunpack.c.h.bf16 %v180
    %v822 = vunpack.c.l.bf16 %v181
    %v823 = vunpack.c.h.bf16 %v181
    %v824 = vunpack.c.l.bf16 %v182
    %v825 = vunpack.c.h.bf16 %v182
    %v826 = vunpack.c.l.bf16 %v183
    %v827 = vunpack.c.h.bf16 %v183
    %v828 = vunpack.c.l.bf16 %v184
    %v829 = vunpack.c.h.bf16 %v184
    %v830 = vunpack.c.l.bf16 %v185
    %v831 = vunpack.c.h.bf16 %v185
    %v832 = vunpack.c.l.bf16 %v186
    %v833 = vunpack.c.h.bf16 %v186
    %v834 = vunpack.c.l.bf16 %v187
    %v835 = vunpack.c.h.bf16 %v187
    %v836 = vunpack.c.l.bf16 %v188
    %v837 = vunpack.c.h.bf16 %v188
    %v838 = vunpack.c.l.bf16 %v189
    %v839 = vunpack.c.h.bf16 %v189
    %v840 = vunpack.c.l.bf16 %v190
    %v841 = vunpack.c.h.bf16 %v190
    %v842 = vunpack.c.l.bf16 %v191
    %v843 = vunpack.c.h.bf16 %v191
    %v844 = vunpack.c.l.bf16 %v192
    %v845 = vunpack.c.h.bf16 %v192
    %v846 = vunpack.c.l.bf16 %v193
    %v847 = vunpack.c.h.bf16 %v193
    %v848 = vunpack.c.l.bf16 %v194
    %v849 = vunpack.c.h.bf16 %v194
    %v850 = vunpack.c.l.bf16 %v195
    %v851 = vunpack.c.h.bf16 %v195
    %v852 = vunpack.c.l.bf16 %v196
    %v853 = vunpack.c.h.bf16 %v196
    %v854 = vunpack.c.l.bf16 %v197
    %v855 = vunpack.c.h.bf16 %v197
    %v856 = vunpack.c.l.bf16 %v198
    %v857 = vunpack.c.h.bf16 %v198
    %v858 = vunpack.c.l.bf16 %v199
    %v859 = vunpack.c.h.bf16 %v199
    %v860 = vunpack.c.l.bf16 %v200
    %v861 = vunpack.c.h.bf16 %v200
    %v862 = vunpack.c.l.bf16 %v201
    %v863 = vunpack.c.h.bf16 %v201
    %v864 = vunpack.c.l.bf16 %v202
    %v865 = vunpack.c.h.bf16 %v202
    %v866 = vunpack.c.l.bf16 %v203
    %v867 = vunpack.c.h.bf16 %v203
    %v868 = vunpack.c.l.bf16 %v204
    %v869 = vunpack.c.h.bf16 %v204
    %v870 = vunpack.c.l.bf16 %v205
    %v871 = vunpack.c.h.bf16 %v205
    %v872 = vunpack.c.l.bf16 %v206
    %v873 = vunpack.c.h.bf16 %v206
    %v874 = vunpack.c.l.bf16 %v207
    %v875 = vunpack.c.h.bf16 %v207
    %v876 = vunpack.c.l.bf16 %v208
    %v877 = vunpack.c.h.bf16 %v208
    %v878 = vunpack.c.l.bf16 %v209
    %v879 = vunpack.c.h.bf16 %v209
    %v880 = vunpack.c.l.bf16 %v210
    %v881 = vunpack.c.h.bf16 %v210
    %v882 = vunpack.c.l.bf16 %v211
    %v883 = vunpack.c.h.bf16 %v211
    %v884 = vunpack.c.l.bf16 %v212
    %v885 = vunpack.c.h.bf16 %v212
    %v886 = vunpack.c.l.bf16 %v213
    %v887 = vunpack.c.h.bf16 %v213
    %v888 = vunpack.c.l.bf16 %v214
    %v889 = vunpack.c.h.bf16 %v214
    %v890 = vunpack.c.l.bf16 %v215
    %v891 = vunpack.c.h.bf16 %v215
    %v892 = vunpack.c.l.bf16 %v216
    %v893 = vunpack.c.h.bf16 %v216
    %v894 = vunpack.c.l.bf16 %v217
    %v895 = vunpack.c.h.bf16 %v217
    %v896 = vunpack.c.l.bf16 %v218
    %v897 = vunpack.c.h.bf16 %v218
    %v898 = vunpack.c.l.bf16 %v219
    %v899 = vunpack.c.h.bf16 %v219
    %v900 = vunpack.c.l.bf16 %v220
    %v901 = vunpack.c.h.bf16 %v220
    %v902 = vunpack.c.l.bf16 %v221
    %v903 = vunpack.c.h.bf16 %v221
    %v904 = vunpack.c.l.bf16 %v222
    %v905 = vunpack.c.h.bf16 %v222
    %v906 = vunpack.c.l.bf16 %v223
    %v907 = vunpack.c.h.bf16 %v223
    %v908 = vunpack.c.l.bf16 %v224
    %v909 = vunpack.c.h.bf16 %v224
    %v910 = vunpack.c.l.bf16 %v225
    %v911 = vunpack.c.h.bf16 %v225
    %v912 = vunpack.c.l.bf16 %v226
    %v913 = vunpack.c.h.bf16 %v226
    %v914 = vunpack.c.l.bf16 %v227
    %v915 = vunpack.c.h.bf16 %v227
    %v916 = vunpack.c.l.bf16 %v228
    %v917 = vunpack.c.h.bf16 %v228
    %v918 = vunpack.c.l.bf16 %v229
    %v919 = vunpack.c.h.bf16 %v229
    %v920 = vunpack.c.l.bf16 %v230
    %v921 = vunpack.c.h.bf16 %v230
    %v922 = vunpack.c.l.bf16 %v231
    %v923 = vunpack.c.h.bf16 %v231
    %v924 = vunpack.c.l.bf16 %v232
    %v925 = vunpack.c.h.bf16 %v232
    %v926 = vunpack.c.l.bf16 %v233
    %v927 = vunpack.c.h.bf16 %v233
    %v928 = vunpack.c.l.bf16 %v234
    %v929 = vunpack.c.h.bf16 %v234
    %v930 = vunpack.c.l.bf16 %v235
    %v931 = vunpack.c.h.bf16 %v235
    %v932 = vunpack.c.l.bf16 %v236
    %v933 = vunpack.c.h.bf16 %v236
    %v934 = vunpack.c.l.bf16 %v237
    %v935 = vunpack.c.h.bf16 %v237
    %v936 = vunpack.c.l.bf16 %v238
    %v937 = vunpack.c.h.bf16 %v238
    %v938 = vunpack.c.l.bf16 %v239
    %v939 = vunpack.c.h.bf16 %v239
    %v940 = vunpack.c.l.bf16 %v240
    %v941 = vunpack.c.h.bf16 %v240
    %v942 = vunpack.c.l.bf16 %v241
    %v943 = vunpack.c.h.bf16 %v241
    %v944 = vunpack.c.l.bf16 %v242
    %v945 = vunpack.c.h.bf16 %v242
    %v946 = vunpack.c.l.bf16 %v243
    %v947 = vunpack.c.h.bf16 %v243
    %v948 = vunpack.c.l.bf16 %v244
    %v949 = vunpack.c.h.bf16 %v244
    %v950 = vunpack.c.l.bf16 %v245
    %v951 = vunpack.c.h.bf16 %v245
    %v952 = vunpack.c.l.bf16 %v246
    %v953 = vunpack.c.h.bf16 %v246
    %v954 = vunpack.c.l.bf16 %v247
    %v955 = vunpack.c.h.bf16 %v247
    %v956 = vunpack.c.l.bf16 %v248
    %v957 = vunpack.c.h.bf16 %v248
    %v958 = vunpack.c.l.bf16 %v249
    %v959 = vunpack.c.h.bf16 %v249
    %v960 = vunpack.c.l.bf16 %v250
    %v961 = vunpack.c.h.bf16 %v250
    %v962 = vunpack.c.l.bf16 %v251
    %v963 = vunpack.c.h.bf16 %v251
    %v964 = vunpack.c.l.bf16 %v252
    %v965 = vunpack.c.h.bf16 %v252
    %v966 = vunpack.c.l.bf16 %v253
    %v967 = vunpack.c.h.bf16 %v253
    %v968 = vunpack.c.l.bf16 %v254
    %v969 = vunpack.c.h.bf16 %v254
    %v970 = vunpack.c.l.bf16 %v255
    %v971 = vunpack.c.h.bf16 %v255
    %v972 = vunpack.c.l.bf16 %v256
    %v973 = vunpack.c.h.bf16 %v256
    %v974 = vunpack.c.l.bf16 %v257
    %v975 = vunpack.c.h.bf16 %v257
    %v976 = vunpack.c.l.bf16 %v258
    %v977 = vunpack.c.h.bf16 %v258
    %v978 = vunpack.c.l.bf16 %v259
    %v979 = vunpack.c.h.bf16 %v259
    %v980 = vunpack.c.l.bf16 %v260
    %v981 = vunpack.c.h.bf16 %v260
    %v982 = vunpack.c.l.bf16 %v261
    %v983 = vunpack.c.h.bf16 %v261
    %v984 = vunpack.c.l.bf16 %v262
    %v985 = vunpack.c.h.bf16 %v262
    %v986 = vunpack.c.l.bf16 %v263
    %v987 = vunpack.c.h.bf16 %v263
    %v988 = vunpack.c.l.bf16 %v264
    %v989 = vunpack.c.h.bf16 %v264
    %v990 = vunpack.c.l.bf16 %v265
    %v991 = vunpack.c.h.bf16 %v265
    %v992 = vunpack.c.l.bf16 %v266
    %v993 = vunpack.c.h.bf16 %v266
    %v994 = vunpack.c.l.bf16 %v267
    %v995 = vunpack.c.h.bf16 %v267
    %v996 = vunpack.c.l.bf16 %v268
    %v997 = vunpack.c.h.bf16 %v268
    %v998 = vunpack.c.l.bf16 %v269
    %v999 = vunpack.c.h.bf16 %v269
    %v1000 = vunpack.c.l.bf16 %v270
    %v1001 = vunpack.c.h.bf16 %v270
    %v1002 = vunpack.c.l.bf16 %v271
    %v1003 = vunpack.c.h.bf16 %v271
    %v1004 = vunpack.c.l.bf16 %v272
    %v1005 = vunpack.c.h.bf16 %v272
    %v1006 = vunpack.c.l.bf16 %v273
    %v1007 = vunpack.c.h.bf16 %v273
    %v1008 = vunpack.c.l.bf16 %v274
    %v1009 = vunpack.c.h.bf16 %v274
    %v1010 = vunpack.c.l.bf16 %v275
    %v1011 = vunpack.c.h.bf16 %v275
    %v1012 = vunpack.c.l.bf16 %v276
    %v1013 = vunpack.c.h.bf16 %v276
    %v1014 = vunpack.c.l.bf16 %v277
    %v1015 = vunpack.c.h.bf16 %v277
    %v1016 = vunpack.c.l.bf16 %v278
    %v1017 = vunpack.c.h.bf16 %v278
    %v1018 = vunpack.c.l.bf16 %v279
    %v1019 = vunpack.c.h.bf16 %v279
    %v1020 = vunpack.c.l.bf16 %v280
    %v1021 = vunpack.c.h.bf16 %v280
    %v1022 = vunpack.c.l.bf16 %v281
    %v1023 = vunpack.c.h.bf16 %v281
    %v1024 = vunpack.c.l.bf16 %v282
    %v1025 = vunpack.c.h.bf16 %v282
    %v1026 = vunpack.c.l.bf16 %v283
    %v1027 = vunpack.c.h.bf16 %v283
    %v1028 = vunpack.c.l.bf16 %v284
    %v1029 = vunpack.c.h.bf16 %v284
    %v1030 = vunpack.c.l.bf16 %v285
    %v1031 = vunpack.c.h.bf16 %v285
    %v1032 = vunpack.c.l.bf16 %v286
    %v1033 = vunpack.c.h.bf16 %v286
    %v1034 = vunpack.c.l.bf16 %v287
    %v1035 = vunpack.c.h.bf16 %v287
    %v1036 = vunpack.c.l.bf16 %v288
    %v1037 = vunpack.c.h.bf16 %v288
    %v1038 = vunpack.c.l.bf16 %v289
    %v1039 = vunpack.c.h.bf16 %v289
    %v1040 = vunpack.c.l.bf16 %v290
    %v1041 = vunpack.c.h.bf16 %v290
    %v1042 = vunpack.c.l.bf16 %v291
    %v1043 = vunpack.c.h.bf16 %v291
    %v1044 = vunpack.c.l.bf16 %v292
    %v1045 = vunpack.c.h.bf16 %v292
    %v1046 = vunpack.c.l.bf16 %v293
    %v1047 = vunpack.c.h.bf16 %v293
    %v1048 = vunpack.c.l.bf16 %v294
    %v1049 = vunpack.c.h.bf16 %v294
    %v1050 = vunpack.c.l.bf16 %v295
    %v1051 = vunpack.c.h.bf16 %v295
    %v1052 = vunpack.c.l.bf16 %v296
    %v1053 = vunpack.c.h.bf16 %v296
    %v1054 = vunpack.c.l.bf16 %v297
    %v1055 = vunpack.c.h.bf16 %v297
    %v1056 = vunpack.c.l.bf16 %v298
    %v1057 = vunpack.c.h.bf16 %v298
    %v1058 = vunpack.c.l.bf16 %v299
    %v1059 = vunpack.c.h.bf16 %v299
    %v1060 = vunpack.c.l.bf16 %v300
    %v1061 = vunpack.c.h.bf16 %v300
    %v1062 = vunpack.c.l.bf16 %v301
    %v1063 = vunpack.c.h.bf16 %v301
    %v1064 = vunpack.c.l.bf16 %v302
    %v1065 = vunpack.c.h.bf16 %v302
    %v1066 = vunpack.c.l.bf16 %v303
    %v1067 = vunpack.c.h.bf16 %v303
    %v1068 = vunpack.c.l.bf16 %v304
    %v1069 = vunpack.c.h.bf16 %v304
    %v1070 = vunpack.c.l.bf16 %v305
    %v1071 = vunpack.c.h.bf16 %v305
    %v1072 = vunpack.c.l.bf16 %v306
    %v1073 = vunpack.c.h.bf16 %v306
    %v1074 = vunpack.c.l.bf16 %v307
    %v1075 = vunpack.c.h.bf16 %v307
    %v1076 = vunpack.c.l.bf16 %v308
    %v1077 = vunpack.c.h.bf16 %v308
    %v1078 = vunpack.c.l.bf16 %v309
    %v1079 = vunpack.c.h.bf16 %v309
    %v1080 = vunpack.c.l.bf16 %v310
    %v1081 = vunpack.c.h.bf16 %v310
    %v1082 = vunpack.c.l.bf16 %v311
    %v1083 = vunpack.c.h.bf16 %v311
    %v1084 = vunpack.c.l.bf16 %v312
    %v1085 = vunpack.c.h.bf16 %v312
    %v1086 = vunpack.c.l.bf16 %v313
    %v1087 = vunpack.c.h.bf16 %v313
    %v1088 = vunpack.c.l.bf16 %v314
    %v1089 = vunpack.c.h.bf16 %v314
    %v1090 = vunpack.c.l.bf16 %v315
    %v1091 = vunpack.c.h.bf16 %v315
    %v1092 = vunpack.c.l.bf16 %v316
    %v1093 = vunpack.c.h.bf16 %v316
    %v1094 = vunpack.c.l.bf16 %v317
    %v1095 = vunpack.c.h.bf16 %v317
    %v1096 = vunpack.c.l.bf16 %v318
    %v1097 = vunpack.c.h.bf16 %v318
    %v1098 = vunpack.c.l.bf16 %v319
    %v1099 = vunpack.c.h.bf16 %v319
    %v1100 = vunpack.c.l.bf16 %v320
    %v1101 = vunpack.c.h.bf16 %v320
    %v1102 = vunpack.c.l.bf16 %v321
    %v1103 = vunpack.c.h.bf16 %v321
    %v1104 = vunpack.c.l.bf16 %v322
    %v1105 = vunpack.c.h.bf16 %v322
    %v1106 = vunpack.c.l.bf16 %v323
    %v1107 = vunpack.c.h.bf16 %v323
    %v1108 = vunpack.c.l.bf16 %v324
    %v1109 = vunpack.c.h.bf16 %v324
    %v1110 = vunpack.c.l.bf16 %v325
    %v1111 = vunpack.c.h.bf16 %v325
    %v1112 = vunpack.c.l.bf16 %v326
    %v1113 = vunpack.c.h.bf16 %v326
    %v1114 = vunpack.c.l.bf16 %v327
    %v1115 = vunpack.c.h.bf16 %v327
    %v1116 = vunpack.c.l.bf16 %v328
    %v1117 = vunpack.c.h.bf16 %v328
    %v1118 = vunpack.c.l.bf16 %v329
    %v1119 = vunpack.c.h.bf16 %v329
    %v1120 = vunpack.c.l.bf16 %v330
    %v1121 = vunpack.c.h.bf16 %v330
    %v1122 = vunpack.c.l.bf16 %v331
    %v1123 = vunpack.c.h.bf16 %v331
    %v1124 = vunpack.c.l.bf16 %v332
    %v1125 = vunpack.c.h.bf16 %v332
    %v1126 = vunpack.c.l.bf16 %v333
    %v1127 = vunpack.c.h.bf16 %v333
    %v1128 = vunpack.c.l.bf16 %v334
    %v1129 = vunpack.c.h.bf16 %v334
    %v1130 = vunpack.c.l.bf16 %v335
    %v1131 = vunpack.c.h.bf16 %v335
    %v1132 = vunpack.c.l.bf16 %v336
    %v1133 = vunpack.c.h.bf16 %v336
    %v1134 = vunpack.c.l.bf16 %v337
    %v1135 = vunpack.c.h.bf16 %v337
    %v1136 = vunpack.c.l.bf16 %v338
    %v1137 = vunpack.c.h.bf16 %v338
    %v1138 = vunpack.c.l.bf16 %v339
    %v1139 = vunpack.c.h.bf16 %v339
    %v1140 = vunpack.c.l.bf16 %v340
    %v1141 = vunpack.c.h.bf16 %v340
    %v1142 = vunpack.c.l.bf16 %v341
    %v1143 = vunpack.c.h.bf16 %v341
    %v1144 = vunpack.c.l.bf16 %v342
    %v1145 = vunpack.c.h.bf16 %v342
    %v1146 = vunpack.c.l.bf16 %v343
    %v1147 = vunpack.c.h.bf16 %v343
    %v1148 = vunpack.c.l.bf16 %v344
    %v1149 = vunpack.c.h.bf16 %v344
    %v1150 = vunpack.c.l.bf16 %v345
    %v1151 = vunpack.c.h.bf16 %v345
    %v1152 = vunpack.c.l.bf16 %v346
    %v1153 = vunpack.c.h.bf16 %v346
    %v1154 = vunpack.c.l.bf16 %v347
    %v1155 = vunpack.c.h.bf16 %v347
    %v1156 = vunpack.c.l.bf16 %v348
    %v1157 = vunpack.c.h.bf16 %v348
    %v1158 = vunpack.c.l.bf16 %v349
    %v1159 = vunpack.c.h.bf16 %v349
    %v1160 = vunpack.c.l.bf16 %v350
    %v1161 = vunpack.c.h.bf16 %v350
    %v1162 = vunpack.c.l.bf16 %v351
    %v1163 = vunpack.c.h.bf16 %v351
    %v1164 = vunpack.c.l.bf16 %v352
    %v1165 = vunpack.c.h.bf16 %v352
    %v1166 = vunpack.c.l.bf16 %v353
    %v1167 = vunpack.c.h.bf16 %v353
    %v1168 = vunpack.c.l.bf16 %v354
    %v1169 = vunpack.c.h.bf16 %v354
    %v1170 = vunpack.c.l.bf16 %v355
    %v1171 = vunpack.c.h.bf16 %v355
    %v1172 = vunpack.c.l.bf16 %v356
    %v1173 = vunpack.c.h.bf16 %v356
    %v1174 = vunpack.c.l.bf16 %v357
    %v1175 = vunpack.c.h.bf16 %v357
    %v1176 = vunpack.c.l.bf16 %v358
    %v1177 = vunpack.c.h.bf16 %v358
    %v1178 = vunpack.c.l.bf16 %v359
    %v1179 = vunpack.c.h.bf16 %v359
    %v1180 = vunpack.c.l.bf16 %v360
    %v1181 = vunpack.c.h.bf16 %v360
    %v1182 = vunpack.c.l.bf16 %v361
    %v1183 = vunpack.c.h.bf16 %v361
    %v1184 = vunpack.c.l.bf16 %v362
    %v1185 = vunpack.c.h.bf16 %v362
    %v1186 = vunpack.c.l.bf16 %v363
    %v1187 = vunpack.c.h.bf16 %v363
    %v1188 = vunpack.c.l.bf16 %v364
    %v1189 = vunpack.c.h.bf16 %v364
    %v1190 = vunpack.c.l.bf16 %v365
    %v1191 = vunpack.c.h.bf16 %v365
    %v1192 = vunpack.c.l.bf16 %v366
    %v1193 = vunpack.c.h.bf16 %v366
    %v1194 = vunpack.c.l.bf16 %v367
    %v1195 = vunpack.c.h.bf16 %v367
    %v1196 = vunpack.c.l.bf16 %v368
    %v1197 = vunpack.c.h.bf16 %v368
    %v1198 = vunpack.c.l.bf16 %v369
    %v1199 = vunpack.c.h.bf16 %v369
    %v1200 = vunpack.c.l.bf16 %v370
    %v1201 = vunpack.c.h.bf16 %v370
    %v1202 = vunpack.c.l.bf16 %v371
    %v1203 = vunpack.c.h.bf16 %v371
    %v1204 = vunpack.c.l.bf16 %v372
    %v1205 = vunpack.c.h.bf16 %v372
    %v1206 = vunpack.c.l.bf16 %v373
    %v1207 = vunpack.c.h.bf16 %v373
    %v1208 = vunpack.c.l.bf16 %v374
    %v1209 = vunpack.c.h.bf16 %v374
    %v1210 = vunpack.c.l.bf16 %v375
    %v1211 = vunpack.c.h.bf16 %v375
    %v1212 = vunpack.c.l.bf16 %v376
    %v1213 = vunpack.c.h.bf16 %v376
    %v1214 = vunpack.c.l.bf16 %v377
    %v1215 = vunpack.c.h.bf16 %v377
    %v1216 = vunpack.c.l.bf16 %v378
    %v1217 = vunpack.c.h.bf16 %v378
    %v1218 = vunpack.c.l.bf16 %v379
    %v1219 = vunpack.c.h.bf16 %v379
    %v1220 = vunpack.c.l.bf16 %v380
    %v1221 = vunpack.c.h.bf16 %v380
    %v1222 = vunpack.c.l.bf16 %v381
    %v1223 = vunpack.c.h.bf16 %v381
    %v1224 = vunpack.c.l.bf16 %v382
    %v1225 = vunpack.c.h.bf16 %v382
    %v1226 = vunpack.c.l.bf16 %v383
    %v1227 = vunpack.c.h.bf16 %v383
    %v1228 = vunpack.c.l.bf16 %v384
    %v1229 = vunpack.c.h.bf16 %v384
    %v1230 = vunpack.c.l.bf16 %v385
    %v1231 = vunpack.c.h.bf16 %v385
    %v1232 = vunpack.c.l.bf16 %v386
    %v1233 = vunpack.c.h.bf16 %v386
    %v1234 = vunpack.c.l.bf16 %v387
    %v1235 = vunpack.c.h.bf16 %v387
    %v1236 = vunpack.c.l.bf16 %v388
    %v1237 = vunpack.c.h.bf16 %v388
    %v1238 = vunpack.c.l.bf16 %v389
    %v1239 = vunpack.c.h.bf16 %v389
    %v1240 = vunpack.c.l.bf16 %v390
    %v1241 = vunpack.c.h.bf16 %v390
    %v1242 = vunpack.c.l.bf16 %v391
    %v1243 = vunpack.c.h.bf16 %v391
    %v1244 = vunpack.c.l.bf16 %v392
    %v1245 = vunpack.c.h.bf16 %v392
    %v1246 = vunpack.c.l.bf16 %v393
    %v1247 = vunpack.c.h.bf16 %v393
    %v1248 = vunpack.c.l.bf16 %v394
    %v1249 = vunpack.c.h.bf16 %v394
    %v1250 = vunpack.c.l.bf16 %v395
    %v1251 = vunpack.c.h.bf16 %v395
    %v1252 = vunpack.c.l.bf16 %v396
    %v1253 = vunpack.c.h.bf16 %v396
    %v1254 = vunpack.c.l.bf16 %v397
    %v1255 = vunpack.c.h.bf16 %v397
    %v1256 = vunpack.c.l.bf16 %v398
    %v1257 = vunpack.c.h.bf16 %v398
    %v1258 = vunpack.c.l.bf16 %v399
    %v1259 = vunpack.c.h.bf16 %v399
    %v1260 = vunpack.c.l.bf16 %v400
    %v1261 = vunpack.c.h.bf16 %v400
    %v1262 = vunpack.c.l.bf16 %v401
    %v1263 = vunpack.c.h.bf16 %v401
    %v1264 = vunpack.c.l.bf16 %v402
    %v1265 = vunpack.c.h.bf16 %v402
    %v1266 = vunpack.c.l.bf16 %v403
    %v1267 = vunpack.c.h.bf16 %v403
    %v1268 = vunpack.c.l.bf16 %v404
    %v1269 = vunpack.c.h.bf16 %v404
    %v1270 = vunpack.c.l.bf16 %v405
    %v1271 = vunpack.c.h.bf16 %v405
    %v1272 = vunpack.c.l.bf16 %v406
    %v1273 = vunpack.c.h.bf16 %v406
    %v1274 = vunpack.c.l.bf16 %v407
    %v1275 = vunpack.c.h.bf16 %v407
    %v1276 = vunpack.c.l.bf16 %v408
    %v1277 = vunpack.c.h.bf16 %v408
    %v1278 = vunpack.c.l.bf16 %v409
    %v1279 = vunpack.c.h.bf16 %v409
    %v1280 = vunpack.c.l.bf16 %v410
    %v1281 = vunpack.c.h.bf16 %v410
    %v1282 = vunpack.c.l.bf16 %v411
    %v1283 = vunpack.c.h.bf16 %v411
    %v1284 = vunpack.c.l.bf16 %v412
    %v1285 = vunpack.c.h.bf16 %v412
    %v1286 = vunpack.c.l.bf16 %v413
    %v1287 = vunpack.c.h.bf16 %v413
    %v1288 = vunpack.c.l.bf16 %v414
    %v1289 = vunpack.c.h.bf16 %v414
    %v1290 = vunpack.c.l.bf16 %v415
    %v1291 = vunpack.c.h.bf16 %v415
    %v1292 = vunpack.c.l.bf16 %v416
    %v1293 = vunpack.c.h.bf16 %v416
    %v1294 = vunpack.c.l.bf16 %v417
    %v1295 = vunpack.c.h.bf16 %v417
    %v1296 = vunpack.c.l.bf16 %v418
    %v1297 = vunpack.c.h.bf16 %v418
    %v1298 = vunpack.c.l.bf16 %v419
    %v1299 = vunpack.c.h.bf16 %v419
    %v1300 = vunpack.c.l.bf16 %v420
    %v1301 = vunpack.c.h.bf16 %v420
    %v1302 = vunpack.c.l.bf16 %v421
    %v1303 = vunpack.c.h.bf16 %v421
    %v1304 = vunpack.c.l.bf16 %v422
    %v1305 = vunpack.c.h.bf16 %v422
    %v1306 = vunpack.c.l.bf16 %v423
    %v1307 = vunpack.c.h.bf16 %v423
    %v1308 = vunpack.c.l.bf16 %v424
    %v1309 = vunpack.c.h.bf16 %v424
    %v1310 = vunpack.c.l.bf16 %v425
    %v1311 = vunpack.c.h.bf16 %v425
    %v1312 = vunpack.c.l.bf16 %v426
    %v1313 = vunpack.c.h.bf16 %v426
    %v1314 = vunpack.c.l.bf16 %v427
    %v1315 = vunpack.c.h.bf16 %v427
    %v1316 = vunpack.c.l.bf16 %v428
    %v1317 = vunpack.c.h.bf16 %v428
    %v1318 = vunpack.c.l.bf16 %v429
    %v1319 = vunpack.c.h.bf16 %v429
    %v1320 = vunpack.c.l.bf16 %v430
    %v1321 = vunpack.c.h.bf16 %v430
    %v1322 = vunpack.c.l.bf16 %v431
    %v1323 = vunpack.c.h.bf16 %v431
    %v1324 = vunpack.c.l.bf16 %v432
    %v1325 = vunpack.c.h.bf16 %v432
    %v1326 = vunpack.c.l.bf16 %v433
    %v1327 = vunpack.c.h.bf16 %v433
    %v1328 = vunpack.c.l.bf16 %v434
    %v1329 = vunpack.c.h.bf16 %v434
    %v1330 = vunpack.c.l.bf16 %v435
    %v1331 = vunpack.c.h.bf16 %v435
    %v1332 = vunpack.c.l.bf16 %v436
    %v1333 = vunpack.c.h.bf16 %v436
    %v1334 = vunpack.c.l.bf16 %v437
    %v1335 = vunpack.c.h.bf16 %v437
    %v1336 = vunpack.c.l.bf16 %v438
    %v1337 = vunpack.c.h.bf16 %v438
    %v1338 = vunpack.c.l.bf16 %v439
    %v1339 = vunpack.c.h.bf16 %v439
    %v1340 = vunpack.c.l.bf16 %v440
    %v1341 = vunpack.c.h.bf16 %v440
    %v1342 = vunpack.c.l.bf16 %v441
    %v1343 = vunpack.c.h.bf16 %v441
    %v1344 = vunpack.c.l.bf16 %v442
    %v1345 = vunpack.c.h.bf16 %v442
    %v1346 = vunpack.c.l.bf16 %v443
    %v1347 = vunpack.c.h.bf16 %v443
    %v1348 = vunpack.c.l.bf16 %v444
    %v1349 = vunpack.c.h.bf16 %v444
    %v1350 = vunpack.c.l.bf16 %v445
    %v1351 = vunpack.c.h.bf16 %v445
    %v1352 = vunpack.c.l.bf16 %v446
    %v1353 = vunpack.c.h.bf16 %v446
    %v1354 = vunpack.c.l.bf16 %v447
    %v1355 = vunpack.c.h.bf16 %v447
    %v1356 = vunpack.c.l.bf16 %v448
    %v1357 = vunpack.c.h.bf16 %v448
    %v1358 = vunpack.c.l.bf16 %v449
    %v1359 = vunpack.c.h.bf16 %v449
    %v1360 = vunpack.c.l.bf16 %v450
    %v1361 = vunpack.c.h.bf16 %v450
    %v1362 = vunpack.c.l.bf16 %v451
    %v1363 = vunpack.c.h.bf16 %v451
    %v1364 = vunpack.c.l.bf16 %v452
    %v1365 = vunpack.c.h.bf16 %v452
    %v1366 = vunpack.c.l.bf16 %v453
    %v1367 = vunpack.c.h.bf16 %v453
    %v1368 = vunpack.c.l.bf16 %v454
    %v1369 = vunpack.c.h.bf16 %v454
    %v1370 = vunpack.c.l.bf16 %v455
    %v1371 = vunpack.c.h.bf16 %v455
    %v1372 = vunpack.c.l.bf16 %v456
    %v1373 = vunpack.c.h.bf16 %v456
    %v1374 = vunpack.c.l.bf16 %v457
    %v1375 = vunpack.c.h.bf16 %v457
    %v1376 = vunpack.c.l.bf16 %v458
    %v1377 = vunpack.c.h.bf16 %v458
    %v1378 = vunpack.c.l.bf16 %v459
    %v1379 = vunpack.c.h.bf16 %v459
    %v1380 = vunpack.c.l.bf16 %v460
    %v1381 = vunpack.c.h.bf16 %v460
    %v1382 = vunpack.c.l.bf16 %v461
    %v1383 = vunpack.c.h.bf16 %v461
    %v1384 = vunpack.c.l.bf16 %v462
    %v1385 = vunpack.c.h.bf16 %v462
    %v1386 = vunpack.c.l.bf16 %v463
    %v1387 = vunpack.c.h.bf16 %v463
    %v1388 = vunpack.c.l.bf16 %v464
    %v1389 = vunpack.c.h.bf16 %v464
    %v1390 = vunpack.c.l.bf16 %v465
    %v1391 = vunpack.c.h.bf16 %v465
    %v1392 = vunpack.c.l.bf16 %v466
    %v1393 = vunpack.c.h.bf16 %v466
    %v1394 = vunpack.c.l.bf16 %v467
    %v1395 = vunpack.c.h.bf16 %v467
    %v1396 = vunpack.c.l.bf16 %v468
    %v1397 = vunpack.c.h.bf16 %v468
    %v1398 = vunpack.c.l.bf16 %v469
    %v1399 = vunpack.c.h.bf16 %v469
    %v1400 = vunpack.c.l.bf16 %v470
    %v1401 = vunpack.c.h.bf16 %v470
    %v1402 = vunpack.c.l.bf16 %v471
    %v1403 = vunpack.c.h.bf16 %v471
    %v1404 = vunpack.c.l.bf16 %v472
    %v1405 = vunpack.c.h.bf16 %v472
    %v1406 = vunpack.c.l.bf16 %v473
    %v1407 = vunpack.c.h.bf16 %v473
    %v1408 = vunpack.c.l.bf16 %v474
    %v1409 = vunpack.c.h.bf16 %v474
    %v1410 = vunpack.c.l.bf16 %v475
    %v1411 = vunpack.c.h.bf16 %v475
    %v1412 = vunpack.c.l.bf16 %v476
    %v1413 = vunpack.c.h.bf16 %v476
    %v1414 = vunpack.c.l.bf16 %v477
    %v1415 = vunpack.c.h.bf16 %v477
    %v1416 = vunpack.c.l.bf16 %v478
    %v1417 = vunpack.c.h.bf16 %v478
    %v1418 = vunpack.c.l.bf16 %v479
    %v1419 = vunpack.c.h.bf16 %v479
    %v1420 = vunpack.c.l.bf16 %v480
    %v1421 = vunpack.c.h.bf16 %v480
    %v1422 = vunpack.c.l.bf16 %v481
    %v1423 = vunpack.c.h.bf16 %v481
    %v1424 = vunpack.c.l.bf16 %v482
    %v1425 = vunpack.c.h.bf16 %v482
    %v1426 = vunpack.c.l.bf16 %v483
    %v1427 = vunpack.c.h.bf16 %v483
    %v1428 = vunpack.c.l.bf16 %v484
    %v1429 = vunpack.c.h.bf16 %v484
    %v1430 = vunpack.c.l.bf16 %v485
    %v1431 = vunpack.c.h.bf16 %v485
    %v1432 = vunpack.c.l.bf16 %v486
    %v1433 = vunpack.c.h.bf16 %v486
    %v1434 = vunpack.c.l.bf16 %v487
    %v1435 = vunpack.c.h.bf16 %v487
    %v1436 = vunpack.c.l.bf16 %v488
    %v1437 = vunpack.c.h.bf16 %v488
    %v1438 = vunpack.c.l.bf16 %v489
    %v1439 = vunpack.c.h.bf16 %v489
    %v1440 = vunpack.c.l.bf16 %v490
    %v1441 = vunpack.c.h.bf16 %v490
    %v1442 = vunpack.c.l.bf16 %v491
    %v1443 = vunpack.c.h.bf16 %v491
    %v1444 = vunpack.c.l.bf16 %v492
    %v1445 = vunpack.c.h.bf16 %v492
    %v1446 = vunpack.c.l.bf16 %v493
    %v1447 = vunpack.c.h.bf16 %v493
    %v1448 = vunpack.c.l.bf16 %v494
    %v1449 = vunpack.c.h.bf16 %v494
    %v1450 = vunpack.c.l.bf16 %v495
    %v1451 = vunpack.c.h.bf16 %v495
    %v1452 = vunpack.c.l.bf16 %v496
    %v1453 = vunpack.c.h.bf16 %v496
    %v1454 = vunpack.c.l.bf16 %v497
    %v1455 = vunpack.c.h.bf16 %v497
    %v1456 = vunpack.c.l.bf16 %v498
    %v1457 = vunpack.c.h.bf16 %v498
    %v1458 = vunpack.c.l.bf16 %v499
    %v1459 = vunpack.c.h.bf16 %v499
    %v1460 = vunpack.c.l.bf16 %v500
    %v1461 = vunpack.c.h.bf16 %v500
    %v1462 = vunpack.c.l.bf16 %v501
    %v1463 = vunpack.c.h.bf16 %v501
    %v1464 = vunpack.c.l.bf16 %v502
    %v1465 = vunpack.c.h.bf16 %v502
    %v1466 = vunpack.c.l.bf16 %v503
    %v1467 = vunpack.c.h.bf16 %v503
    %v1468 = vunpack.c.l.bf16 %v504
    %v1469 = vunpack.c.h.bf16 %v504
    %v1470 = vunpack.c.l.bf16 %v505
    %v1471 = vunpack.c.h.bf16 %v505
    %v1472 = vunpack.c.l.bf16 %v506
    %v1473 = vunpack.c.h.bf16 %v506
    %v1474 = vunpack.c.l.bf16 %v507
    %v1475 = vunpack.c.h.bf16 %v507
    %v1476 = vunpack.c.l.bf16 %v508
    %v1477 = vunpack.c.h.bf16 %v508
    %v1478 = vunpack.c.l.bf16 %v509
    %v1479 = vunpack.c.h.bf16 %v509
    %v1480 = vunpack.c.l.bf16 %v510
    %v1481 = vunpack.c.h.bf16 %v510
    %v1482 = vunpack.c.l.bf16 %v511
    %v1483 = vunpack.c.h.bf16 %v511
    %v1484 = vunpack.c.l.bf16 %v512
    %v1485 = vunpack.c.h.bf16 %v512
    %v1486 = vunpack.c.l.bf16 %v513
    %v1487 = vunpack.c.h.bf16 %v513
    %v1488 = vunpack.c.l.bf16 %v514
    %v1489 = vunpack.c.h.bf16 %v514
    %v1490 = vunpack.c.l.bf16 %v515
    %v1491 = vunpack.c.h.bf16 %v515
    %v1492 = vunpack.c.l.bf16 %v516
    %v1493 = vunpack.c.h.bf16 %v516
    %v1494 = vunpack.c.l.bf16 %v517
    %v1495 = vunpack.c.h.bf16 %v517
    %v1496 = vunpack.c.l.bf16 %v518
    %v1497 = vunpack.c.h.bf16 %v518
    %v1498 = vunpack.c.l.bf16 %v519
    %v1499 = vunpack.c.h.bf16 %v519
    %v1500 = vunpack.c.l.bf16 %v520
    %v1501 = vunpack.c.h.bf16 %v520
    %v1502 = vunpack.c.l.bf16 %v521
    %v1503 = vunpack.c.h.bf16 %v521
    %v1504 = vunpack.c.l.bf16 %v522
    %v1505 = vunpack.c.h.bf16 %v522
    %v1506 = vunpack.c.l.bf16 %v523
    %v1507 = vunpack.c.h.bf16 %v523
    %v1508 = vunpack.c.l.bf16 %v524
    %v1509 = vunpack.c.h.bf16 %v524
    %v1510 = vunpack.c.l.bf16 %v525
    %v1511 = vunpack.c.h.bf16 %v525
    %v1512 = vunpack.c.l.bf16 %v526
    %v1513 = vunpack.c.h.bf16 %v526
    %v1514 = vunpack.c.l.bf16 %v527
    %v1515 = vunpack.c.h.bf16 %v527
    %v1516 = vunpack.c.l.bf16 %v528
    %v1517 = vunpack.c.h.bf16 %v528
    %v1518 = vunpack.c.l.bf16 %v529
    %v1519 = vunpack.c.h.bf16 %v529
    %v1520 = vunpack.c.l.bf16 %v530
    %v1521 = vunpack.c.h.bf16 %v530
    %v1522 = vunpack.c.l.bf16 %v531
    %v1523 = vunpack.c.h.bf16 %v531
    %v1524 = vunpack.c.l.bf16 %v532
    %v1525 = vunpack.c.h.bf16 %v532
    %v1526 = vunpack.c.l.bf16 %v533
    %v1527 = vunpack.c.h.bf16 %v533
    %v1528 = vunpack.c.l.bf16 %v534
    %v1529 = vunpack.c.h.bf16 %v534
    %v1530 = vunpack.c.l.bf16 %v535
    %v1531 = vunpack.c.h.bf16 %v535
    %v1532 = vunpack.c.l.bf16 %v536
    %v1533 = vunpack.c.h.bf16 %v536
    %v1534 = vunpack.c.l.bf16 %v537
    %v1535 = vunpack.c.h.bf16 %v537
    %v1536 = vunpack.c.l.bf16 %v538
    %v1537 = vunpack.c.h.bf16 %v538
    %v1538 = vunpack.c.l.bf16 %v539
    %v1539 = vunpack.c.h.bf16 %v539
    %v1540 = vunpack.c.l.bf16 %v540
    %v1541 = vunpack.c.h.bf16 %v540
    %v1542 = vunpack.c.l.bf16 %v541
    %v1543 = vunpack.c.h.bf16 %v541
    %v1544 = vunpack.c.l.bf16 %v542
    %v1545 = vunpack.c.h.bf16 %v542
    %v1546 = vunpack.c.l.bf16 %v543
    %v1547 = vunpack.c.h.bf16 %v543
    %v1548 = vunpack.c.l.bf16 %v544
    %v1549 = vunpack.c.h.bf16 %v544
    %v1550 = vunpack.c.l.bf16 %v545
    %v1551 = vunpack.c.h.bf16 %v545
    %v1552 = vunpack.c.l.bf16 %v546
    %v1553 = vunpack.c.h.bf16 %v546
    %v1554 = vunpack.c.l.bf16 %v547
    %v1555 = vunpack.c.h.bf16 %v547
    %v1556 = vunpack.c.l.bf16 %v548
    %v1557 = vunpack.c.h.bf16 %v548
    %v1558 = vunpack.c.l.bf16 %v549
    %v1559 = vunpack.c.h.bf16 %v549
    %v1560 = vunpack.c.l.bf16 %v550
    %v1561 = vunpack.c.h.bf16 %v550
    %v1562 = vunpack.c.l.bf16 %v551
    %v1563 = vunpack.c.h.bf16 %v551
    %v1564 = vunpack.c.l.bf16 %v552
    %v1565 = vunpack.c.h.bf16 %v552
    %v1566 = vunpack.c.l.bf16 %v553
    %v1567 = vunpack.c.h.bf16 %v553
    %v1568 = vunpack.c.l.bf16 %v554
    %v1569 = vunpack.c.h.bf16 %v554
    %v1570 = vunpack.c.l.bf16 %v555
    %v1571 = vunpack.c.h.bf16 %v555
    %v1572 = vunpack.c.l.bf16 %v556
    %v1573 = vunpack.c.h.bf16 %v556
    %v1574 = vunpack.c.l.bf16 %v557
    %v1575 = vunpack.c.h.bf16 %v557
    %v1576 = vunpack.c.l.bf16 %v558
    %v1577 = vunpack.c.h.bf16 %v558
    %v1578 = vunpack.c.l.bf16 %v559
    %v1579 = vunpack.c.h.bf16 %v559
    %v1580 = vunpack.c.l.bf16 %v560
    %v1581 = vunpack.c.h.bf16 %v560
    %v1582 = vunpack.c.l.bf16 %v561
    %v1583 = vunpack.c.h.bf16 %v561
    %v1584 = vunpack.c.l.bf16 %v562
    %v1585 = vunpack.c.h.bf16 %v562
    %v1586 = vunpack.c.l.bf16 %v563
    %v1587 = vunpack.c.h.bf16 %v563
    %v1588 = vld [vmem:[#allocation2] sm:$0xff]
    %v1589 = vld [vmem:[#allocation2 + $0x8] sm:$0xff]
    %v1590 = vld [vmem:[#allocation2 + $0x10] sm:$0xff]
    %v1591 = vld [vmem:[#allocation2 + $0x18] sm:$0xff]
    %v1592 = vld [vmem:[#allocation2 + $0x20] sm:$0xff]
    %v1593 = vld [vmem:[#allocation2 + $0x28] sm:$0xff]
    %v1594 = vld [vmem:[#allocation2 + $0x30] sm:$0xff]
    %v1595 = vld [vmem:[#allocation2 + $0x38] sm:$0xff]
    %v1596 = vld [vmem:[#allocation7] sm:$0xff]
    %v1598 = vlaneseq
    %v1599 = vshrl.u32 %v1598, 7
    %v1600 = vsub.s32 0, %v1599
    %v1601 = vrot.slane %v1596, %v1600
    %v1602 = vlaneseq
    %v1603 = vshrl.u32 %v1602, 7
    %v1604 = vsub.s32 1, %v1603
    %v1605 = vrot.slane %v1596, %v1604
    %v1606 = vlaneseq
    %v1607 = vshrl.u32 %v1606, 7
    %v1608 = vsub.s32 2, %v1607
    %v1609 = vrot.slane %v1596, %v1608
    %v1610 = vlaneseq
    %v1611 = vshrl.u32 %v1610, 7
    %v1612 = vsub.s32 3, %v1611
    %v1613 = vrot.slane %v1596, %v1612
    %v1614 = vlaneseq
    %v1615 = vshrl.u32 %v1614, 7
    %v1616 = vsub.s32 4, %v1615
    %v1617 = vrot.slane %v1596, %v1616
    %v1618 = vlaneseq
    %v1619 = vshrl.u32 %v1618, 7
    %v1620 = vsub.s32 5, %v1619
    %v1621 = vrot.slane %v1596, %v1620
    %v1622 = vlaneseq
    %v1623 = vshrl.u32 %v1622, 7
    %v1624 = vsub.s32 6, %v1623
    %v1625 = vrot.slane %v1596, %v1624
    %v1626 = vlaneseq
    %v1627 = vshrl.u32 %v1626, 7
    %v1628 = vsub.s32 7, %v1627
    %v1629 = vrot.slane %v1596, %v1628
    %1638 = vmatprep.subr.mxu0 %v565
    %1639 = vmatpush1.msra.mxu0 %v564
    %1640 = vmatprep.subr.mxu0 %v573
    %1641 = vmatpush1.msra.mxu0 %v572
    %1642 = vmatprep.subr.mxu0 %v581
    %1643 = vmatpush1.msra.mxu0 %v580
    %1644 = vmatprep.subr.mxu0 %v589
    %1645 = vmatpush1.msra.mxu0 %v588
    %1646 = vmatprep.subr.mxu0 %v597
    %1647 = vmatpush1.msra.mxu0 %v596
    %1648 = vmatprep.subr.mxu0 %v605
    %1649 = vmatpush1.msra.mxu0 %v604
    %1650 = vmatprep.subr.mxu0 %v613
    %1651 = vmatpush1.msra.mxu0 %v612
    %1652 = vmatprep.subr.mxu0 %v621
    %1653 = vmatpush1.msra.mxu0 %v620
    %1654 = vmatprep.subr.mxu0 %v629
    %1655 = vmatpush1.msra.mxu0 %v628
    %1656 = vmatprep.subr.mxu0 %v637
    %1657 = vmatpush1.msra.mxu0 %v636
    %1658 = vmatprep.subr.mxu0 %v645
    %1659 = vmatpush1.msra.mxu0 %v644
    %1660 = vmatprep.subr.mxu0 %v653
    %1661 = vmatpush1.msra.mxu0 %v652
    %1662 = vmatprep.subr.mxu0 %v661
    %1663 = vmatpush1.msra.mxu0 %v660
    %1664 = vmatprep.subr.mxu0 %v669
    %1665 = vmatpush1.msra.mxu0 %v668
    %1666 = vmatprep.subr.mxu0 %v677
    %1667 = vmatpush1.msra.mxu0 %v676
    %1668 = vmatprep.subr.mxu0 %v685
    %1669 = vmatpush1.msra.mxu0 %v684
    %1670 = vmatprep.subr.mxu0 %v693
    %1671 = vmatpush1.msra.mxu0 %v692
    %1672 = vmatprep.subr.mxu0 %v701
    %1673 = vmatpush1.msra.mxu0 %v700
    %1674 = vmatprep.subr.mxu0 %v709
    %1675 = vmatpush1.msra.mxu0 %v708
    %1676 = vmatprep.subr.mxu0 %v717
    %1677 = vmatpush1.msra.mxu0 %v716
    %1678 = vmatprep.subr.mxu0 %v725
    %1679 = vmatpush1.msra.mxu0 %v724
    %1680 = vmatprep.subr.mxu0 %v733
    %1681 = vmatpush1.msra.mxu0 %v732
    %1682 = vmatprep.subr.mxu0 %v741
    %1683 = vmatpush1.msra.mxu0 %v740
    %1684 = vmatprep.subr.mxu0 %v749
    %1685 = vmatpush1.msra.mxu0 %v748
    %1686 = vmatprep.subr.mxu0 %v757
    %1687 = vmatpush1.msra.mxu0 %v756
    %1688 = vmatprep.subr.mxu0 %v765
    %1689 = vmatpush1.msra.mxu0 %v764
    %1690 = vmatprep.subr.mxu0 %v773
    %1691 = vmatpush1.msra.mxu0 %v772
    %1692 = vmatprep.subr.mxu0 %v781
    %1693 = vmatpush1.msra.mxu0 %v780
    %1694 = vmatprep.subr.mxu0 %v789
    %1695 = vmatpush1.msra.mxu0 %v788
    %1696 = vmatprep.subr.mxu0 %v797
    %1697 = vmatpush1.msra.mxu0 %v796
    %1698 = vmatprep.subr.mxu0 %v805
    %1699 = vmatpush1.msra.mxu0 %v804
    %1700 = vmatprep.subr.mxu0 %v813
    %1701 = vmatpush1.msra.mxu0 %v812
    %1702 = vmatprep.mubr.f32.mxu0 %v1589
    %1703 = vmatmul.mubr.f32.gmra.mrb[0].mxu0 %v1588
    %v1704 = vpop.f32.mrb[0].mxu0
    %v1705 = vadd.f32 %v1601, %v1704
    %v1706 = vpop.f32.mrb[0].mxu0
    %v1707 = vadd.f32 %v1605, %v1706
    %1708 = vdwg.mxu0
    %1709 = vmatprep.subr.mxu0 %v821
    %1710 = vmatpush1.msra.mxu0 %v820
    %1711 = vmatprep.subr.mxu0 %v829
    %1712 = vmatpush1.msra.mxu0 %v828
    %1713 = vmatprep.subr.mxu0 %v837
    %1714 = vmatpush1.msra.mxu0 %v836
    %1715 = vmatprep.subr.mxu0 %v845
    %1716 = vmatpush1.msra.mxu0 %v844
    %1717 = vmatprep.subr.mxu0 %v853
    %1718 = vmatpush1.msra.mxu0 %v852
    %1719 = vmatprep.subr.mxu0 %v861
    %1720 = vmatpush1.msra.mxu0 %v860
    %1721 = vmatprep.subr.mxu0 %v869
    %1722 = vmatpush1.msra.mxu0 %v868
    %1723 = vmatprep.subr.mxu0 %v877
    %1724 = vmatpush1.msra.mxu0 %v876
    %1725 = vmatprep.subr.mxu0 %v885
    %1726 = vmatpush1.msra.mxu0 %v884
    %1727 = vmatprep.subr.mxu0 %v893
    %1728 = vmatpush1.msra.mxu0 %v892
    %1729 = vmatprep.subr.mxu0 %v901
    %1730 = vmatpush1.msra.mxu0 %v900
    %1731 = vmatprep.subr.mxu0 %v909
    %1732 = vmatpush1.msra.mxu0 %v908
    %1733 = vmatprep.subr.mxu0 %v917
    %1734 = vmatpush1.msra.mxu0 %v916
    %1735 = vmatprep.subr.mxu0 %v925
    %1736 = vmatpush1.msra.mxu0 %v924
    %1737 = vmatprep.subr.mxu0 %v933
    %1738 = vmatpush1.msra.mxu0 %v932
    %1739 = vmatprep.subr.mxu0 %v941
    %1740 = vmatpush1.msra.mxu0 %v940
    %1741 = vmatprep.subr.mxu0 %v949
    %1742 = vmatpush1.msra.mxu0 %v948
    %1743 = vmatprep.subr.mxu0 %v957
    %1744 = vmatpush1.msra.mxu0 %v956
    %1745 = vmatprep.subr.mxu0 %v965
    %1746 = vmatpush1.msra.mxu0 %v964
    %1747 = vmatprep.subr.mxu0 %v973
    %1748 = vmatpush1.msra.mxu0 %v972
    %1749 = vmatprep.subr.mxu0 %v981
    %1750 = vmatpush1.msra.mxu0 %v980
    %1751 = vmatprep.subr.mxu0 %v989
    %1752 = vmatpush1.msra.mxu0 %v988
    %1753 = vmatprep.subr.mxu0 %v997
    %1754 = vmatpush1.msra.mxu0 %v996
    %1755 = vmatprep.subr.mxu0 %v1005
    %1756 = vmatpush1.msra.mxu0 %v1004
    %1757 = vmatprep.subr.mxu0 %v1013
    %1758 = vmatpush1.msra.mxu0 %v1012
    %1759 = vmatprep.subr.mxu0 %v1021
    %1760 = vmatpush1.msra.mxu0 %v1020
    %1761 = vmatprep.subr.mxu0 %v1029
    %1762 = vmatpush1.msra.mxu0 %v1028
    %1763 = vmatprep.subr.mxu0 %v1037
    %1764 = vmatpush1.msra.mxu0 %v1036
    %1765 = vmatprep.subr.mxu0 %v1045
    %1766 = vmatpush1.msra.mxu0 %v1044
    %1767 = vmatprep.subr.mxu0 %v1053
    %1768 = vmatpush1.msra.mxu0 %v1052
    %1769 = vmatprep.subr.mxu0 %v1061
    %1770 = vmatpush1.msra.mxu0 %v1060
    %1771 = vmatprep.subr.mxu0 %v1069
    %1772 = vmatpush1.msra.mxu0 %v1068
    %1773 = vmatprep.mubr.f32.mxu0 %v1591
    %1774 = vmatmul.mubr.f32.gmra.mrb[0].mxu0 %v1590
    %v1775 = vpop.f32.mrb[0].mxu0
    %v1776 = vadd.f32 %v1705, %v1775
    %v1777 = vpop.f32.mrb[0].mxu0
    %v1778 = vadd.f32 %v1707, %v1777
    %1779 = vdwg.mxu0
    %1780 = vmatprep.subr.mxu0 %v1077
    %1781 = vmatpush1.msra.mxu0 %v1076
    %1782 = vmatprep.subr.mxu0 %v1085
    %1783 = vmatpush1.msra.mxu0 %v1084
    %1784 = vmatprep.subr.mxu0 %v1093
    %1785 = vmatpush1.msra.mxu0 %v1092
    %1786 = vmatprep.subr.mxu0 %v1101
    %1787 = vmatpush1.msra.mxu0 %v1100
    %1788 = vmatprep.subr.mxu0 %v1109
    %1789 = vmatpush1.msra.mxu0 %v1108
    %1790 = vmatprep.subr.mxu0 %v1117
    %1791 = vmatpush1.msra.mxu0 %v1116
    %1792 = vmatprep.subr.mxu0 %v1125
    %1793 = vmatpush1.msra.mxu0 %v1124
    %1794 = vmatprep.subr.mxu0 %v1133
    %1795 = vmatpush1.msra.mxu0 %v1132
    %1796 = vmatprep.subr.mxu0 %v1141
    %1797 = vmatpush1.msra.mxu0 %v1140
    %1798 = vmatprep.subr.mxu0 %v1149
    %1799 = vmatpush1.msra.mxu0 %v1148
    %1800 = vmatprep.subr.mxu0 %v1157
    %1801 = vmatpush1.msra.mxu0 %v1156
    %1802 = vmatprep.subr.mxu0 %v1165
    %1803 = vmatpush1.msra.mxu0 %v1164
    %1804 = vmatprep.subr.mxu0 %v1173
    %1805 = vmatpush1.msra.mxu0 %v1172
    %1806 = vmatprep.subr.mxu0 %v1181
    %1807 = vmatpush1.msra.mxu0 %v1180
    %1808 = vmatprep.subr.mxu0 %v1189
    %1809 = vmatpush1.msra.mxu0 %v1188
    %1810 = vmatprep.subr.mxu0 %v1197
    %1811 = vmatpush1.msra.mxu0 %v1196
    %1812 = vmatprep.subr.mxu0 %v1205
    %1813 = vmatpush1.msra.mxu0 %v1204
    %1814 = vmatprep.subr.mxu0 %v1213
    %1815 = vmatpush1.msra.mxu0 %v1212
    %1816 = vmatprep.subr.mxu0 %v1221
    %1817 = vmatpush1.msra.mxu0 %v1220
    %1818 = vmatprep.subr.mxu0 %v1229
    %1819 = vmatpush1.msra.mxu0 %v1228
    %1820 = vmatprep.subr.mxu0 %v1237
    %1821 = vmatpush1.msra.mxu0 %v1236
    %1822 = vmatprep.subr.mxu0 %v1245
    %1823 = vmatpush1.msra.mxu0 %v1244
    %1824 = vmatprep.subr.mxu0 %v1253
    %1825 = vmatpush1.msra.mxu0 %v1252
    %1826 = vmatprep.subr.mxu0 %v1261
    %1827 = vmatpush1.msra.mxu0 %v1260
    %1828 = vmatprep.subr.mxu0 %v1269
    %1829 = vmatpush1.msra.mxu0 %v1268
    %1830 = vmatprep.subr.mxu0 %v1277
    %1831 = vmatpush1.msra.mxu0 %v1276
    %1832 = vmatprep.subr.mxu0 %v1285
    %1833 = vmatpush1.msra.mxu0 %v1284
    %1834 = vmatprep.subr.mxu0 %v1293
    %1835 = vmatpush1.msra.mxu0 %v1292
    %1836 = vmatprep.subr.mxu0 %v1301
    %1837 = vmatpush1.msra.mxu0 %v1300
    %1838 = vmatprep.subr.mxu0 %v1309
    %1839 = vmatpush1.msra.mxu0 %v1308
    %1840 = vmatprep.subr.mxu0 %v1317
    %1841 = vmatpush1.msra.mxu0 %v1316
    %1842 = vmatprep.subr.mxu0 %v1325
    %1843 = vmatpush1.msra.mxu0 %v1324
    %1844 = vmatprep.mubr.f32.mxu0 %v1593
    %1845 = vmatmul.mubr.f32.gmra.mrb[0].mxu0 %v1592
    %v1846 = vpop.f32.mrb[0].mxu0
    %v1847 = vadd.f32 %v1776, %v1846
    %v1848 = vpop.f32.mrb[0].mxu0
    %v1849 = vadd.f32 %v1778, %v1848
    %1850 = vdwg.mxu0
    %1851 = vmatprep.subr.mxu0 %v1333
    %1852 = vmatpush1.msra.mxu0 %v1332
    %1853 = vmatprep.subr.mxu0 %v1341
    %1854 = vmatpush1.msra.mxu0 %v1340
    %1855 = vmatprep.subr.mxu0 %v1349
    %1856 = vmatpush1.msra.mxu0 %v1348
    %1857 = vmatprep.subr.mxu0 %v1357
    %1858 = vmatpush1.msra.mxu0 %v1356
    %1859 = vmatprep.subr.mxu0 %v1365
    %1860 = vmatpush1.msra.mxu0 %v1364
    %1861 = vmatprep.subr.mxu0 %v1373
    %1862 = vmatpush1.msra.mxu0 %v1372
    %1863 = vmatprep.subr.mxu0 %v1381
    %1864 = vmatpush1.msra.mxu0 %v1380
    %1865 = vmatprep.subr.mxu0 %v1389
    %1866 = vmatpush1.msra.mxu0 %v1388
    %1867 = vmatprep.subr.mxu0 %v1397
    %1868 = vmatpush1.msra.mxu0 %v1396
    %1869 = vmatprep.subr.mxu0 %v1405
    %1870 = vmatpush1.msra.mxu0 %v1404
    %1871 = vmatprep.subr.mxu0 %v1413
    %1872 = vmatpush1.msra.mxu0 %v1412
    %1873 = vmatprep.subr.mxu0 %v1421
    %1874 = vmatpush1.msra.mxu0 %v1420
    %1875 = vmatprep.subr.mxu0 %v1429
    %1876 = vmatpush1.msra.mxu0 %v1428
    %1877 = vmatprep.subr.mxu0 %v1437
    %1878 = vmatpush1.msra.mxu0 %v1436
    %1879 = vmatprep.subr.mxu0 %v1445
    %1880 = vmatpush1.msra.mxu0 %v1444
    %1881 = vmatprep.subr.mxu0 %v1453
    %1882 = vmatpush1.msra.mxu0 %v1452
    %1883 = vmatprep.subr.mxu0 %v1461
    %1884 = vmatpush1.msra.mxu0 %v1460
    %1885 = vmatprep.subr.mxu0 %v1469
    %1886 = vmatpush1.msra.mxu0 %v1468
    %1887 = vmatprep.subr.mxu0 %v1477
    %1888 = vmatpush1.msra.mxu0 %v1476
    %1889 = vmatprep.subr.mxu0 %v1485
    %1890 = vmatpush1.msra.mxu0 %v1484
    %1891 = vmatprep.subr.mxu0 %v1493
    %1892 = vmatpush1.msra.mxu0 %v1492
    %1893 = vmatprep.subr.mxu0 %v1501
    %1894 = vmatpush1.msra.mxu0 %v1500
    %1895 = vmatprep.subr.mxu0 %v1509
    %1896 = vmatpush1.msra.mxu0 %v1508
    %1897 = vmatprep.subr.mxu0 %v1517
    %1898 = vmatpush1.msra.mxu0 %v1516
    %1899 = vmatprep.subr.mxu0 %v1525
    %1900 = vmatpush1.msra.mxu0 %v1524
    %1901 = vmatprep.subr.mxu0 %v1533
    %1902 = vmatpush1.msra.mxu0 %v1532
    %1903 = vmatprep.subr.mxu0 %v1541
    %1904 = vmatpush1.msra.mxu0 %v1540
    %1905 = vmatprep.subr.mxu0 %v1549
    %1906 = vmatpush1.msra.mxu0 %v1548
    %1907 = vmatprep.subr.mxu0 %v1557
    %1908 = vmatpush1.msra.mxu0 %v1556
    %1909 = vmatprep.subr.mxu0 %v1565
    %1910 = vmatpush1.msra.mxu0 %v1564
    %1911 = vmatprep.subr.mxu0 %v1573
    %1912 = vmatpush1.msra.mxu0 %v1572
    %1913 = vmatprep.subr.mxu0 %v1581
    %1914 = vmatpush1.msra.mxu0 %v1580
    %1915 = vmatprep.mubr.f32.mxu0 %v1595
    %1916 = vmatmul.mubr.f32.gmra.mrb[0].mxu0 %v1594
    %v1917 = vpop.f32.mrb[0].mxu0
    %v1918 = vadd.f32 %v1847, %v1917
    %v1919 = vpop.f32.mrb[0].mxu0
    %v1920 = vadd.f32 %v1849, %v1919
    %1921 = vdwg.mxu0
    %1922 = vmatprep.subr.mxu0 %v567
    %1923 = vmatpush1.msra.mxu0 %v566
    %1924 = vmatprep.subr.mxu0 %v575
    %1925 = vmatpush1.msra.mxu0 %v574
    %1926 = vmatprep.subr.mxu0 %v583
    %1927 = vmatpush1.msra.mxu0 %v582
    %1928 = vmatprep.subr.mxu0 %v591
    %1929 = vmatpush1.msra.mxu0 %v590
    %1930 = vmatprep.subr.mxu0 %v599
    %1931 = vmatpush1.msra.mxu0 %v598
    %1932 = vmatprep.subr.mxu0 %v607
    %1933 = vmatpush1.msra.mxu0 %v606
    %1934 = vmatprep.subr.mxu0 %v615
    %1935 = vmatpush1.msra.mxu0 %v614
    %1936 = vmatprep.subr.mxu0 %v623
    %1937 = vmatpush1.msra.mxu0 %v622
    %1938 = vmatprep.subr.mxu0 %v631
    %1939 = vmatpush1.msra.mxu0 %v630
    %1940 = vmatprep.subr.mxu0 %v639
    %1941 = vmatpush1.msra.mxu0 %v638
    %1942 = vmatprep.subr.mxu0 %v647
    %1943 = vmatpush1.msra.mxu0 %v646
    %1944 = vmatprep.subr.mxu0 %v655
    %1945 = vmatpush1.msra.mxu0 %v654
    %1946 = vmatprep.subr.mxu0 %v663
    %1947 = vmatpush1.msra.mxu0 %v662
    %1948 = vmatprep.subr.mxu0 %v671
    %1949 = vmatpush1.msra.mxu0 %v670
    %1950 = vmatprep.subr.mxu0 %v679
    %1951 = vmatpush1.msra.mxu0 %v678
    %1952 = vmatprep.subr.mxu0 %v687
    %1953 = vmatpush1.msra.mxu0 %v686
    %1954 = vmatprep.subr.mxu0 %v695
    %1955 = vmatpush1.msra.mxu0 %v694
    %1956 = vmatprep.subr.mxu0 %v703
    %1957 = vmatpush1.msra.mxu0 %v702
    %1958 = vmatprep.subr.mxu0 %v711
    %1959 = vmatpush1.msra.mxu0 %v710
    %1960 = vmatprep.subr.mxu0 %v719
    %1961 = vmatpush1.msra.mxu0 %v718
    %1962 = vmatprep.subr.mxu0 %v727
    %1963 = vmatpush1.msra.mxu0 %v726
    %1964 = vmatprep.subr.mxu0 %v735
    %1965 = vmatpush1.msra.mxu0 %v734
    %1966 = vmatprep.subr.mxu0 %v743
    %1967 = vmatpush1.msra.mxu0 %v742
    %1968 = vmatprep.subr.mxu0 %v751
    %1969 = vmatpush1.msra.mxu0 %v750
    %1970 = vmatprep.subr.mxu0 %v759
    %1971 = vmatpush1.msra.mxu0 %v758
    %1972 = vmatprep.subr.mxu0 %v767
    %1973 = vmatpush1.msra.mxu0 %v766
    %1974 = vmatprep.subr.mxu0 %v775
    %1975 = vmatpush1.msra.mxu0 %v774
    %1976 = vmatprep.subr.mxu0 %v783
    %1977 = vmatpush1.msra.mxu0 %v782
    %1978 = vmatprep.subr.mxu0 %v791
    %1979 = vmatpush1.msra.mxu0 %v790
    %1980 = vmatprep.subr.mxu0 %v799
    %1981 = vmatpush1.msra.mxu0 %v798
    %1982 = vmatprep.subr.mxu0 %v807
    %1983 = vmatpush1.msra.mxu0 %v806
    %1984 = vmatprep.subr.mxu0 %v815
    %1985 = vmatpush1.msra.mxu0 %v814
    %1986 = vmatprep.mubr.f32.mxu0 %v1589
    %1987 = vmatmul.mubr.f32.gmra.mrb[0].mxu0 %v1588
    %v1988 = vpop.f32.mrb[0].mxu0
    %v1989 = vadd.f32 %v1609, %v1988
    %v1990 = vpop.f32.mrb[0].mxu0
    %v1991 = vadd.f32 %v1613, %v1990
    %1992 = vdwg.mxu0
    %1993 = vmatprep.subr.mxu0 %v823
    %1994 = vmatpush1.msra.mxu0 %v822
    %1995 = vmatprep.subr.mxu0 %v831
    %1996 = vmatpush1.msra.mxu0 %v830
    %1997 = vmatprep.subr.mxu0 %v839
    %1998 = vmatpush1.msra.mxu0 %v838
    %1999 = vmatprep.subr.mxu0 %v847
    %2000 = vmatpush1.msra.mxu0 %v846
    %2001 = vmatprep.subr.mxu0 %v855
    %2002 = vmatpush1.msra.mxu0 %v854
    %2003 = vmatprep.subr.mxu0 %v863
    %2004 = vmatpush1.msra.mxu0 %v862
    %2005 = vmatprep.subr.mxu0 %v871
    %2006 = vmatpush1.msra.mxu0 %v870
    %2007 = vmatprep.subr.mxu0 %v879
    %2008 = vmatpush1.msra.mxu0 %v878
    %2009 = vmatprep.subr.mxu0 %v887
    %2010 = vmatpush1.msra.mxu0 %v886
    %2011 = vmatprep.subr.mxu0 %v895
    %2012 = vmatpush1.msra.mxu0 %v894
    %2013 = vmatprep.subr.mxu0 %v903
    %2014 = vmatpush1.msra.mxu0 %v902
    %2015 = vmatprep.subr.mxu0 %v911
    %2016 = vmatpush1.msra.mxu0 %v910
    %2017 = vmatprep.subr.mxu0 %v919
    %2018 = vmatpush1.msra.mxu0 %v918
    %2019 = vmatprep.subr.mxu0 %v927
    %2020 = vmatpush1.msra.mxu0 %v926
    %2021 = vmatprep.subr.mxu0 %v935
    %2022 = vmatpush1.msra.mxu0 %v934
    %2023 = vmatprep.subr.mxu0 %v943
    %2024 = vmatpush1.msra.mxu0 %v942
    %2025 = vmatprep.subr.mxu0 %v951
    %2026 = vmatpush1.msra.mxu0 %v950
    %2027 = vmatprep.subr.mxu0 %v959
    %2028 = vmatpush1.msra.mxu0 %v958
    %2029 = vmatprep.subr.mxu0 %v967
    %2030 = vmatpush1.msra.mxu0 %v966
    %2031 = vmatprep.subr.mxu0 %v975
    %2032 = vmatpush1.msra.mxu0 %v974
    %2033 = vmatprep.subr.mxu0 %v983
    %2034 = vmatpush1.msra.mxu0 %v982
    %2035 = vmatprep.subr.mxu0 %v991
    %2036 = vmatpush1.msra.mxu0 %v990
    %2037 = vmatprep.subr.mxu0 %v999
    %2038 = vmatpush1.msra.mxu0 %v998
    %2039 = vmatprep.subr.mxu0 %v1007
    %2040 = vmatpush1.msra.mxu0 %v1006
    %2041 = vmatprep.subr.mxu0 %v1015
    %2042 = vmatpush1.msra.mxu0 %v1014
    %2043 = vmatprep.subr.mxu0 %v1023
    %2044 = vmatpush1.msra.mxu0 %v1022
    %2045 = vmatprep.subr.mxu0 %v1031
    %2046 = vmatpush1.msra.mxu0 %v1030
    %2047 = vmatprep.subr.mxu0 %v1039
    %2048 = vmatpush1.msra.mxu0 %v1038
    %2049 = vmatprep.subr.mxu0 %v1047
    %2050 = vmatpush1.msra.mxu0 %v1046
    %2051 = vmatprep.subr.mxu0 %v1055
    %2052 = vmatpush1.msra.mxu0 %v1054
    %2053 = vmatprep.subr.mxu0 %v1063
    %2054 = vmatpush1.msra.mxu0 %v1062
    %2055 = vmatprep.subr.mxu0 %v1071
    %2056 = vmatpush1.msra.mxu0 %v1070
    %2057 = vmatprep.mubr.f32.mxu0 %v1591
    %2058 = vmatmul.mubr.f32.gmra.mrb[0].mxu0 %v1590
    %v2059 = vpop.f32.mrb[0].mxu0
    %v2060 = vadd.f32 %v1989, %v2059
    %v2061 = vpop.f32.mrb[0].mxu0
    %v2062 = vadd.f32 %v1991, %v2061
    %2063 = vdwg.mxu0
    %2064 = vmatprep.subr.mxu0 %v1079
    %2065 = vmatpush1.msra.mxu0 %v1078
    %2066 = vmatprep.subr.mxu0 %v1087
    %2067 = vmatpush1.msra.mxu0 %v1086
    %2068 = vmatprep.subr.mxu0 %v1095
    %2069 = vmatpush1.msra.mxu0 %v1094
    %2070 = vmatprep.subr.mxu0 %v1103
    %2071 = vmatpush1.msra.mxu0 %v1102
    %2072 = vmatprep.subr.mxu0 %v1111
    %2073 = vmatpush1.msra.mxu0 %v1110
    %2074 = vmatprep.subr.mxu0 %v1119
    %2075 = vmatpush1.msra.mxu0 %v1118
    %2076 = vmatprep.subr.mxu0 %v1127
    %2077 = vmatpush1.msra.mxu0 %v1126
    %2078 = vmatprep.subr.mxu0 %v1135
    %2079 = vmatpush1.msra.mxu0 %v1134
    %2080 = vmatprep.subr.mxu0 %v1143
    %2081 = vmatpush1.msra.mxu0 %v1142
    %2082 = vmatprep.subr.mxu0 %v1151
    %2083 = vmatpush1.msra.mxu0 %v1150
    %2084 = vmatprep.subr.mxu0 %v1159
    %2085 = vmatpush1.msra.mxu0 %v1158
    %2086 = vmatprep.subr.mxu0 %v1167
    %2087 = vmatpush1.msra.mxu0 %v1166
    %2088 = vmatprep.subr.mxu0 %v1175
    %2089 = vmatpush1.msra.mxu0 %v1174
    %2090 = vmatprep.subr.mxu0 %v1183
    %2091 = vmatpush1.msra.mxu0 %v1182
    %2092 = vmatprep.subr.mxu0 %v1191
    %2093 = vmatpush1.msra.mxu0 %v1190
    %2094 = vmatprep.subr.mxu0 %v1199
    %2095 = vmatpush1.msra.mxu0 %v1198
    %2096 = vmatprep.subr.mxu0 %v1207
    %2097 = vmatpush1.msra.mxu0 %v1206
    %2098 = vmatprep.subr.mxu0 %v1215
    %2099 = vmatpush1.msra.mxu0 %v1214
    %2100 = vmatprep.subr.mxu0 %v1223
    %2101 = vmatpush1.msra.mxu0 %v1222
    %2102 = vmatprep.subr.mxu0 %v1231
    %2103 = vmatpush1.msra.mxu0 %v1230
    %2104 = vmatprep.subr.mxu0 %v1239
    %2105 = vmatpush1.msra.mxu0 %v1238
    %2106 = vmatprep.subr.mxu0 %v1247
    %2107 = vmatpush1.msra.mxu0 %v1246
    %2108 = vmatprep.subr.mxu0 %v1255
    %2109 = vmatpush1.msra.mxu0 %v1254
    %2110 = vmatprep.subr.mxu0 %v1263
    %2111 = vmatpush1.msra.mxu0 %v1262
    %2112 = vmatprep.subr.mxu0 %v1271
    %2113 = vmatpush1.msra.mxu0 %v1270
    %2114 = vmatprep.subr.mxu0 %v1279
    %2115 = vmatpush1.msra.mxu0 %v1278
    %2116 = vmatprep.subr.mxu0 %v1287
    %2117 = vmatpush1.msra.mxu0 %v1286
    %2118 = vmatprep.subr.mxu0 %v1295
    %2119 = vmatpush1.msra.mxu0 %v1294
    %2120 = vmatprep.subr.mxu0 %v1303
    %2121 = vmatpush1.msra.mxu0 %v1302
    %2122 = vmatprep.subr.mxu0 %v1311
    %2123 = vmatpush1.msra.mxu0 %v1310
    %2124 = vmatprep.subr.mxu0 %v1319
    %2125 = vmatpush1.msra.mxu0 %v1318
    %2126 = vmatprep.subr.mxu0 %v1327
    %2127 = vmatpush1.msra.mxu0 %v1326
    %2128 = vmatprep.mubr.f32.mxu0 %v1593
    %2129 = vmatmul.mubr.f32.gmra.mrb[0].mxu0 %v1592
    %v2130 = vpop.f32.mrb[0].mxu0
    %v2131 = vadd.f32 %v2060, %v2130
    %v2132 = vpop.f32.mrb[0].mxu0
    %v2133 = vadd.f32 %v2062, %v2132
    %2134 = vdwg.mxu0
    %2135 = vmatprep.subr.mxu0 %v1335
    %2136 = vmatpush1.msra.mxu0 %v1334
    %2137 = vmatprep.subr.mxu0 %v1343
    %2138 = vmatpush1.msra.mxu0 %v1342
    %2139 = vmatprep.subr.mxu0 %v1351
    %2140 = vmatpush1.msra.mxu0 %v1350
    %2141 = vmatprep.subr.mxu0 %v1359
    %2142 = vmatpush1.msra.mxu0 %v1358
    %2143 = vmatprep.subr.mxu0 %v1367
    %2144 = vmatpush1.msra.mxu0 %v1366
    %2145 = vmatprep.subr.mxu0 %v1375
    %2146 = vmatpush1.msra.mxu0 %v1374
    %2147 = vmatprep.subr.mxu0 %v1383
    %2148 = vmatpush1.msra.mxu0 %v1382
    %2149 = vmatprep.subr.mxu0 %v1391
    %2150 = vmatpush1.msra.mxu0 %v1390
    %2151 = vmatprep.subr.mxu0 %v1399
    %2152 = vmatpush1.msra.mxu0 %v1398
    %2153 = vmatprep.subr.mxu0 %v1407
    %2154 = vmatpush1.msra.mxu0 %v1406
    %2155 = vmatprep.subr.mxu0 %v1415
    %2156 = vmatpush1.msra.mxu0 %v1414
    %2157 = vmatprep.subr.mxu0 %v1423
    %2158 = vmatpush1.msra.mxu0 %v1422
    %2159 = vmatprep.subr.mxu0 %v1431
    %2160 = vmatpush1.msra.mxu0 %v1430
    %2161 = vmatprep.subr.mxu0 %v1439
    %2162 = vmatpush1.msra.mxu0 %v1438
    %2163 = vmatprep.subr.mxu0 %v1447
    %2164 = vmatpush1.msra.mxu0 %v1446
    %2165 = vmatprep.subr.mxu0 %v1455
    %2166 = vmatpush1.msra.mxu0 %v1454
    %2167 = vmatprep.subr.mxu0 %v1463
    %2168 = vmatpush1.msra.mxu0 %v1462
    %2169 = vmatprep.subr.mxu0 %v1471
    %2170 = vmatpush1.msra.mxu0 %v1470
    %2171 = vmatprep.subr.mxu0 %v1479
    %2172 = vmatpush1.msra.mxu0 %v1478
    %2173 = vmatprep.subr.mxu0 %v1487
    %2174 = vmatpush1.msra.mxu0 %v1486
    %2175 = vmatprep.subr.mxu0 %v1495
    %2176 = vmatpush1.msra.mxu0 %v1494
    %2177 = vmatprep.subr.mxu0 %v1503
    %2178 = vmatpush1.msra.mxu0 %v1502
    %2179 = vmatprep.subr.mxu0 %v1511
    %2180 = vmatpush1.msra.mxu0 %v1510
    %2181 = vmatprep.subr.mxu0 %v1519
    %2182 = vmatpush1.msra.mxu0 %v1518
    %2183 = vmatprep.subr.mxu0 %v1527
    %2184 = vmatpush1.msra.mxu0 %v1526
    %2185 = vmatprep.subr.mxu0 %v1535
    %2186 = vmatpush1.msra.mxu0 %v1534
    %2187 = vmatprep.subr.mxu0 %v1543
    %2188 = vmatpush1.msra.mxu0 %v1542
    %2189 = vmatprep.subr.mxu0 %v1551
    %2190 = vmatpush1.msra.mxu0 %v1550
    %2191 = vmatprep.subr.mxu0 %v1559
    %2192 = vmatpush1.msra.mxu0 %v1558
    %2193 = vmatprep.subr.mxu0 %v1567
    %2194 = vmatpush1.msra.mxu0 %v1566
    %2195 = vmatprep.subr.mxu0 %v1575
    %2196 = vmatpush1.msra.mxu0 %v1574
    %2197 = vmatprep.subr.mxu0 %v1583
    %2198 = vmatpush1.msra.mxu0 %v1582
    %2199 = vmatprep.mubr.f32.mxu0 %v1595
    %2200 = vmatmul.mubr.f32.gmra.mrb[0].mxu0 %v1594
    %v2201 = vpop.f32.mrb[0].mxu0
    %v2202 = vadd.f32 %v2131, %v2201
    %v2203 = vpop.f32.mrb[0].mxu0
    %v2204 = vadd.f32 %v2133, %v2203
    %2205 = vdwg.mxu0
    %2206 = vmatprep.subr.mxu0 %v569
    %2207 = vmatpush1.msra.mxu0 %v568
    %2208 = vmatprep.subr.mxu0 %v577
    %2209 = vmatpush1.msra.mxu0 %v576
    %2210 = vmatprep.subr.mxu0 %v585
    %2211 = vmatpush1.msra.mxu0 %v584
    %2212 = vmatprep.subr.mxu0 %v593
    %2213 = vmatpush1.msra.mxu0 %v592
    %2214 = vmatprep.subr.mxu0 %v601
    %2215 = vmatpush1.msra.mxu0 %v600
    %2216 = vmatprep.subr.mxu0 %v609
    %2217 = vmatpush1.msra.mxu0 %v608
    %2218 = vmatprep.subr.mxu0 %v617
    %2219 = vmatpush1.msra.mxu0 %v616
    %2220 = vmatprep.subr.mxu0 %v625
    %2221 = vmatpush1.msra.mxu0 %v624
    %2222 = vmatprep.subr.mxu0 %v633
    %2223 = vmatpush1.msra.mxu0 %v632
    %2224 = vmatprep.subr.mxu0 %v641
    %2225 = vmatpush1.msra.mxu0 %v640
    %2226 = vmatprep.subr.mxu0 %v649
    %2227 = vmatpush1.msra.mxu0 %v648
    %2228 = vmatprep.subr.mxu0 %v657
    %2229 = vmatpush1.msra.mxu0 %v656
    %2230 = vmatprep.subr.mxu0 %v665
    %2231 = vmatpush1.msra.mxu0 %v664
    %2232 = vmatprep.subr.mxu0 %v673
    %2233 = vmatpush1.msra.mxu0 %v672
    %2234 = vmatprep.subr.mxu0 %v681
    %2235 = vmatpush1.msra.mxu0 %v680
    %2236 = vmatprep.subr.mxu0 %v689
    %2237 = vmatpush1.msra.mxu0 %v688
    %2238 = vmatprep.subr.mxu0 %v697
    %2239 = vmatpush1.msra.mxu0 %v696
    %2240 = vmatprep.subr.mxu0 %v705
    %2241 = vmatpush1.msra.mxu0 %v704
    %2242 = vmatprep.subr.mxu0 %v713
    %2243 = vmatpush1.msra.mxu0 %v712
    %2244 = vmatprep.subr.mxu0 %v721
    %2245 = vmatpush1.msra.mxu0 %v720
    %2246 = vmatprep.subr.mxu0 %v729
    %2247 = vmatpush1.msra.mxu0 %v728
    %2248 = vmatprep.subr.mxu0 %v737
    %2249 = vmatpush1.msra.mxu0 %v736
    %2250 = vmatprep.subr.mxu0 %v745
    %2251 = vmatpush1.msra.mxu0 %v744
    %2252 = vmatprep.subr.mxu0 %v753
    %2253 = vmatpush1.msra.mxu0 %v752
    %2254 = vmatprep.subr.mxu0 %v761
    %2255 = vmatpush1.msra.mxu0 %v760
    %2256 = vmatprep.subr.mxu0 %v769
    %2257 = vmatpush1.msra.mxu0 %v768
    %2258 = vmatprep.subr.mxu0 %v777
    %2259 = vmatpush1.msra.mxu0 %v776
    %2260 = vmatprep.subr.mxu0 %v785
    %2261 = vmatpush1.msra.mxu0 %v784
    %2262 = vmatprep.subr.mxu0 %v793
    %2263 = vmatpush1.msra.mxu0 %v792
    %2264 = vmatprep.subr.mxu0 %v801
    %2265 = vmatpush1.msra.mxu0 %v800
    %2266 = vmatprep.subr.mxu0 %v809
    %2267 = vmatpush1.msra.mxu0 %v808
    %2268 = vmatprep.subr.mxu0 %v817
    %2269 = vmatpush1.msra.mxu0 %v816
    %2270 = vmatprep.mubr.f32.mxu0 %v1589
    %2271 = vmatmul.mubr.f32.gmra.mrb[0].mxu0 %v1588
    %v2272 = vpop.f32.mrb[0].mxu0
    %v2273 = vadd.f32 %v1617, %v2272
    %v2274 = vpop.f32.mrb[0].mxu0
    %v2275 = vadd.f32 %v1621, %v2274
    %2276 = vdwg.mxu0
    %2277 = vmatprep.subr.mxu0 %v825
    %2278 = vmatpush1.msra.mxu0 %v824
    %2279 = vmatprep.subr.mxu0 %v833
    %2280 = vmatpush1.msra.mxu0 %v832
    %2281 = vmatprep.subr.mxu0 %v841
    %2282 = vmatpush1.msra.mxu0 %v840
    %2283 = vmatprep.subr.mxu0 %v849
    %2284 = vmatpush1.msra.mxu0 %v848
    %2285 = vmatprep.subr.mxu0 %v857
    %2286 = vmatpush1.msra.mxu0 %v856
    %2287 = vmatprep.subr.mxu0 %v865
    %2288 = vmatpush1.msra.mxu0 %v864
    %2289 = vmatprep.subr.mxu0 %v873
    %2290 = vmatpush1.msra.mxu0 %v872
    %2291 = vmatprep.subr.mxu0 %v881
    %2292 = vmatpush1.msra.mxu0 %v880
    %2293 = vmatprep.subr.mxu0 %v889
    %2294 = vmatpush1.msra.mxu0 %v888
    %2295 = vmatprep.subr.mxu0 %v897
    %2296 = vmatpush1.msra.mxu0 %v896
    %2297 = vmatprep.subr.mxu0 %v905
    %2298 = vmatpush1.msra.mxu0 %v904
    %2299 = vmatprep.subr.mxu0 %v913
    %2300 = vmatpush1.msra.mxu0 %v912
    %2301 = vmatprep.subr.mxu0 %v921
    %2302 = vmatpush1.msra.mxu0 %v920
    %2303 = vmatprep.subr.mxu0 %v929
    %2304 = vmatpush1.msra.mxu0 %v928
    %2305 = vmatprep.subr.mxu0 %v937
    %2306 = vmatpush1.msra.mxu0 %v936
    %2307 = vmatprep.subr.mxu0 %v945
    %2308 = vmatpush1.msra.mxu0 %v944
    %2309 = vmatprep.subr.mxu0 %v953
    %2310 = vmatpush1.msra.mxu0 %v952
    %2311 = vmatprep.subr.mxu0 %v961
    %2312 = vmatpush1.msra.mxu0 %v960
    %2313 = vmatprep.subr.mxu0 %v969
    %2314 = vmatpush1.msra.mxu0 %v968
    %2315 = vmatprep.subr.mxu0 %v977
    %2316 = vmatpush1.msra.mxu0 %v976
    %2317 = vmatprep.subr.mxu0 %v985
    %2318 = vmatpush1.msra.mxu0 %v984
    %2319 = vmatprep.subr.mxu0 %v993
    %2320 = vmatpush1.msra.mxu0 %v992
    %2321 = vmatprep.subr.mxu0 %v1001
    %2322 = vmatpush1.msra.mxu0 %v1000
    %2323 = vmatprep.subr.mxu0 %v1009
    %2324 = vmatpush1.msra.mxu0 %v1008
    %2325 = vmatprep.subr.mxu0 %v1017
    %2326 = vmatpush1.msra.mxu0 %v1016
    %2327 = vmatprep.subr.mxu0 %v1025
    %2328 = vmatpush1.msra.mxu0 %v1024
    %2329 = vmatprep.subr.mxu0 %v1033
    %2330 = vmatpush1.msra.mxu0 %v1032
    %2331 = vmatprep.subr.mxu0 %v1041
    %2332 = vmatpush1.msra.mxu0 %v1040
    %2333 = vmatprep.subr.mxu0 %v1049
    %2334 = vmatpush1.msra.mxu0 %v1048
    %2335 = vmatprep.subr.mxu0 %v1057
    %2336 = vmatpush1.msra.mxu0 %v1056
    %2337 = vmatprep.subr.mxu0 %v1065
    %2338 = vmatpush1.msra.mxu0 %v1064
    %2339 = vmatprep.subr.mxu0 %v1073
    %2340 = vmatpush1.msra.mxu0 %v1072
    %2341 = vmatprep.mubr.f32.mxu0 %v1591
    %2342 = vmatmul.mubr.f32.gmra.mrb[0].mxu0 %v1590
    %v2343 = vpop.f32.mrb[0].mxu0
    %v2344 = vadd.f32 %v2273, %v2343
    %v2345 = vpop.f32.mrb[0].mxu0
    %v2346 = vadd.f32 %v2275, %v2345
    %2347 = vdwg.mxu0
    %2348 = vmatprep.subr.mxu0 %v1081
    %2349 = vmatpush1.msra.mxu0 %v1080
    %2350 = vmatprep.subr.mxu0 %v1089
    %2351 = vmatpush1.msra.mxu0 %v1088
    %2352 = vmatprep.subr.mxu0 %v1097
    %2353 = vmatpush1.msra.mxu0 %v1096
    %2354 = vmatprep.subr.mxu0 %v1105
    %2355 = vmatpush1.msra.mxu0 %v1104
    %2356 = vmatprep.subr.mxu0 %v1113
    %2357 = vmatpush1.msra.mxu0 %v1112
    %2358 = vmatprep.subr.mxu0 %v1121
    %2359 = vmatpush1.msra.mxu0 %v1120
    %2360 = vmatprep.subr.mxu0 %v1129
    %2361 = vmatpush1.msra.mxu0 %v1128
    %2362 = vmatprep.subr.mxu0 %v1137
    %2363 = vmatpush1.msra.mxu0 %v1136
    %2364 = vmatprep.subr.mxu0 %v1145
    %2365 = vmatpush1.msra.mxu0 %v1144
    %2366 = vmatprep.subr.mxu0 %v1153
    %2367 = vmatpush1.msra.mxu0 %v1152
    %2368 = vmatprep.subr.mxu0 %v1161
    %2369 = vmatpush1.msra.mxu0 %v1160
    %2370 = vmatprep.subr.mxu0 %v1169
    %2371 = vmatpush1.msra.mxu0 %v1168
    %2372 = vmatprep.subr.mxu0 %v1177
    %2373 = vmatpush1.msra.mxu0 %v1176
    %2374 = vmatprep.subr.mxu0 %v1185
    %2375 = vmatpush1.msra.mxu0 %v1184
    %2376 = vmatprep.subr.mxu0 %v1193
    %2377 = vmatpush1.msra.mxu0 %v1192
    %2378 = vmatprep.subr.mxu0 %v1201
    %2379 = vmatpush1.msra.mxu0 %v1200
    %2380 = vmatprep.subr.mxu0 %v1209
    %2381 = vmatpush1.msra.mxu0 %v1208
    %2382 = vmatprep.subr.mxu0 %v1217
    %2383 = vmatpush1.msra.mxu0 %v1216
    %2384 = vmatprep.subr.mxu0 %v1225
    %2385 = vmatpush1.msra.mxu0 %v1224
    %2386 = vmatprep.subr.mxu0 %v1233
    %2387 = vmatpush1.msra.mxu0 %v1232
    %2388 = vmatprep.subr.mxu0 %v1241
    %2389 = vmatpush1.msra.mxu0 %v1240
    %2390 = vmatprep.subr.mxu0 %v1249
    %2391 = vmatpush1.msra.mxu0 %v1248
    %2392 = vmatprep.subr.mxu0 %v1257
    %2393 = vmatpush1.msra.mxu0 %v1256
    %2394 = vmatprep.subr.mxu0 %v1265
    %2395 = vmatpush1.msra.mxu0 %v1264
    %2396 = vmatprep.subr.mxu0 %v1273
    %2397 = vmatpush1.msra.mxu0 %v1272
    %2398 = vmatprep.subr.mxu0 %v1281
    %2399 = vmatpush1.msra.mxu0 %v1280
    %2400 = vmatprep.subr.mxu0 %v1289
    %2401 = vmatpush1.msra.mxu0 %v1288
    %2402 = vmatprep.subr.mxu0 %v1297
    %2403 = vmatpush1.msra.mxu0 %v1296
    %2404 = vmatprep.subr.mxu0 %v1305
    %2405 = vmatpush1.msra.mxu0 %v1304
    %2406 = vmatprep.subr.mxu0 %v1313
    %2407 = vmatpush1.msra.mxu0 %v1312
    %2408 = vmatprep.subr.mxu0 %v1321
    %2409 = vmatpush1.msra.mxu0 %v1320
    %2410 = vmatprep.subr.mxu0 %v1329
    %2411 = vmatpush1.msra.mxu0 %v1328
    %2412 = vmatprep.mubr.f32.mxu0 %v1593
    %2413 = vmatmul.mubr.f32.gmra.mrb[0].mxu0 %v1592
    %v2414 = vpop.f32.mrb[0].mxu0
    %v2415 = vadd.f32 %v2344, %v2414
    %v2416 = vpop.f32.mrb[0].mxu0
    %v2417 = vadd.f32 %v2346, %v2416
    %2418 = vdwg.mxu0
    %2419 = vmatprep.subr.mxu0 %v1337
    %2420 = vmatpush1.msra.mxu0 %v1336
    %2421 = vmatprep.subr.mxu0 %v1345
    %2422 = vmatpush1.msra.mxu0 %v1344
    %2423 = vmatprep.subr.mxu0 %v1353
    %2424 = vmatpush1.msra.mxu0 %v1352
    %2425 = vmatprep.subr.mxu0 %v1361
    %2426 = vmatpush1.msra.mxu0 %v1360
    %2427 = vmatprep.subr.mxu0 %v1369
    %2428 = vmatpush1.msra.mxu0 %v1368
    %2429 = vmatprep.subr.mxu0 %v1377
    %2430 = vmatpush1.msra.mxu0 %v1376
    %2431 = vmatprep.subr.mxu0 %v1385
    %2432 = vmatpush1.msra.mxu0 %v1384
    %2433 = vmatprep.subr.mxu0 %v1393
    %2434 = vmatpush1.msra.mxu0 %v1392
    %2435 = vmatprep.subr.mxu0 %v1401
    %2436 = vmatpush1.msra.mxu0 %v1400
    %2437 = vmatprep.subr.mxu0 %v1409
    %2438 = vmatpush1.msra.mxu0 %v1408
    %2439 = vmatprep.subr.mxu0 %v1417
    %2440 = vmatpush1.msra.mxu0 %v1416
    %2441 = vmatprep.subr.mxu0 %v1425
    %2442 = vmatpush1.msra.mxu0 %v1424
    %2443 = vmatprep.subr.mxu0 %v1433
    %2444 = vmatpush1.msra.mxu0 %v1432
    %2445 = vmatprep.subr.mxu0 %v1441
    %2446 = vmatpush1.msra.mxu0 %v1440
    %2447 = vmatprep.subr.mxu0 %v1449
    %2448 = vmatpush1.msra.mxu0 %v1448
    %2449 = vmatprep.subr.mxu0 %v1457
    %2450 = vmatpush1.msra.mxu0 %v1456
    %2451 = vmatprep.subr.mxu0 %v1465
    %2452 = vmatpush1.msra.mxu0 %v1464
    %2453 = vmatprep.subr.mxu0 %v1473
    %2454 = vmatpush1.msra.mxu0 %v1472
    %2455 = vmatprep.subr.mxu0 %v1481
    %2456 = vmatpush1.msra.mxu0 %v1480
    %2457 = vmatprep.subr.mxu0 %v1489
    %2458 = vmatpush1.msra.mxu0 %v1488
    %2459 = vmatprep.subr.mxu0 %v1497
    %2460 = vmatpush1.msra.mxu0 %v1496
    %2461 = vmatprep.subr.mxu0 %v1505
    %2462 = vmatpush1.msra.mxu0 %v1504
    %2463 = vmatprep.subr.mxu0 %v1513
    %2464 = vmatpush1.msra.mxu0 %v1512
    %2465 = vmatprep.subr.mxu0 %v1521
    %2466 = vmatpush1.msra.mxu0 %v1520
    %2467 = vmatprep.subr.mxu0 %v1529
    %2468 = vmatpush1.msra.mxu0 %v1528
    %2469 = vmatprep.subr.mxu0 %v1537
    %2470 = vmatpush1.msra.mxu0 %v1536
    %2471 = vmatprep.subr.mxu0 %v1545
    %2472 = vmatpush1.msra.mxu0 %v1544
    %2473 = vmatprep.subr.mxu0 %v1553
    %2474 = vmatpush1.msra.mxu0 %v1552
    %2475 = vmatprep.subr.mxu0 %v1561
    %2476 = vmatpush1.msra.mxu0 %v1560
    %2477 = vmatprep.subr.mxu0 %v1569
    %2478 = vmatpush1.msra.mxu0 %v1568
    %2479 = vmatprep.subr.mxu0 %v1577
    %2480 = vmatpush1.msra.mxu0 %v1576
    %2481 = vmatprep.subr.mxu0 %v1585
    %2482 = vmatpush1.msra.mxu0 %v1584
    %2483 = vmatprep.mubr.f32.mxu0 %v1595
    %2484 = vmatmul.mubr.f32.gmra.mrb[0].mxu0 %v1594
    %v2485 = vpop.f32.mrb[0].mxu0
    %v2486 = vadd.f32 %v2415, %v2485
    %v2487 = vpop.f32.mrb[0].mxu0
    %v2488 = vadd.f32 %v2417, %v2487
    %2489 = vdwg.mxu0
    %2490 = vmatprep.subr.mxu0 %v571
    %2491 = vmatpush1.msra.mxu0 %v570
    %2492 = vmatprep.subr.mxu0 %v579
    %2493 = vmatpush1.msra.mxu0 %v578
    %2494 = vmatprep.subr.mxu0 %v587
    %2495 = vmatpush1.msra.mxu0 %v586
    %2496 = vmatprep.subr.mxu0 %v595
    %2497 = vmatpush1.msra.mxu0 %v594
    %2498 = vmatprep.subr.mxu0 %v603
    %2499 = vmatpush1.msra.mxu0 %v602
    %2500 = vmatprep.subr.mxu0 %v611
    %2501 = vmatpush1.msra.mxu0 %v610
    %2502 = vmatprep.subr.mxu0 %v619
    %2503 = vmatpush1.msra.mxu0 %v618
    %2504 = vmatprep.subr.mxu0 %v627
    %2505 = vmatpush1.msra.mxu0 %v626
    %2506 = vmatprep.subr.mxu0 %v635
    %2507 = vmatpush1.msra.mxu0 %v634
    %2508 = vmatprep.subr.mxu0 %v643
    %2509 = vmatpush1.msra.mxu0 %v642
    %2510 = vmatprep.subr.mxu0 %v651
    %2511 = vmatpush1.msra.mxu0 %v650
    %2512 = vmatprep.subr.mxu0 %v659
    %2513 = vmatpush1.msra.mxu0 %v658
    %2514 = vmatprep.subr.mxu0 %v667
    %2515 = vmatpush1.msra.mxu0 %v666
    %2516 = vmatprep.subr.mxu0 %v675
    %2517 = vmatpush1.msra.mxu0 %v674
    %2518 = vmatprep.subr.mxu0 %v683
    %2519 = vmatpush1.msra.mxu0 %v682
    %2520 = vmatprep.subr.mxu0 %v691
    %2521 = vmatpush1.msra.mxu0 %v690
    %2522 = vmatprep.subr.mxu0 %v699
    %2523 = vmatpush1.msra.mxu0 %v698
    %2524 = vmatprep.subr.mxu0 %v707
    %2525 = vmatpush1.msra.mxu0 %v706
    %2526 = vmatprep.subr.mxu0 %v715
    %2527 = vmatpush1.msra.mxu0 %v714
    %2528 = vmatprep.subr.mxu0 %v723
    %2529 = vmatpush1.msra.mxu0 %v722
    %2530 = vmatprep.subr.mxu0 %v731
    %2531 = vmatpush1.msra.mxu0 %v730
    %2532 = vmatprep.subr.mxu0 %v739
    %2533 = vmatpush1.msra.mxu0 %v738
    %2534 = vmatprep.subr.mxu0 %v747
    %2535 = vmatpush1.msra.mxu0 %v746
    %2536 = vmatprep.subr.mxu0 %v755
    %2537 = vmatpush1.msra.mxu0 %v754
    %2538 = vmatprep.subr.mxu0 %v763
    %2539 = vmatpush1.msra.mxu0 %v762
    %2540 = vmatprep.subr.mxu0 %v771
    %2541 = vmatpush1.msra.mxu0 %v770
    %2542 = vmatprep.subr.mxu0 %v779
    %2543 = vmatpush1.msra.mxu0 %v778
    %2544 = vmatprep.subr.mxu0 %v787
    %2545 = vmatpush1.msra.mxu0 %v786
    %2546 = vmatprep.subr.mxu0 %v795
    %2547 = vmatpush1.msra.mxu0 %v794
    %2548 = vmatprep.subr.mxu0 %v803
    %2549 = vmatpush1.msra.mxu0 %v802
    %2550 = vmatprep.subr.mxu0 %v811
    %2551 = vmatpush1.msra.mxu0 %v810
    %2552 = vmatprep.subr.mxu0 %v819
    %2553 = vmatpush1.msra.mxu0 %v818
    %2554 = vmatprep.mubr.f32.mxu0 %v1589
    %2555 = vmatmul.mubr.f32.gmra.mrb[0].mxu0 %v1588
    %v2556 = vpop.f32.mrb[0].mxu0
    %v2557 = vadd.f32 %v1625, %v2556
    %v2558 = vpop.f32.mrb[0].mxu0
    %v2559 = vadd.f32 %v1629, %v2558
    %2560 = vdwg.mxu0
    %2561 = vmatprep.subr.mxu0 %v827
    %2562 = vmatpush1.msra.mxu0 %v826
    %2563 = vmatprep.subr.mxu0 %v835
    %2564 = vmatpush1.msra.mxu0 %v834
    %2565 = vmatprep.subr.mxu0 %v843
    %2566 = vmatpush1.msra.mxu0 %v842
    %2567 = vmatprep.subr.mxu0 %v851
    %2568 = vmatpush1.msra.mxu0 %v850
    %2569 = vmatprep.subr.mxu0 %v859
    %2570 = vmatpush1.msra.mxu0 %v858
    %2571 = vmatprep.subr.mxu0 %v867
    %2572 = vmatpush1.msra.mxu0 %v866
    %2573 = vmatprep.subr.mxu0 %v875
    %2574 = vmatpush1.msra.mxu0 %v874
    %2575 = vmatprep.subr.mxu0 %v883
    %2576 = vmatpush1.msra.mxu0 %v882
    %2577 = vmatprep.subr.mxu0 %v891
    %2578 = vmatpush1.msra.mxu0 %v890
    %2579 = vmatprep.subr.mxu0 %v899
    %2580 = vmatpush1.msra.mxu0 %v898
    %2581 = vmatprep.subr.mxu0 %v907
    %2582 = vmatpush1.msra.mxu0 %v906
    %2583 = vmatprep.subr.mxu0 %v915
    %2584 = vmatpush1.msra.mxu0 %v914
    %2585 = vmatprep.subr.mxu0 %v923
    %2586 = vmatpush1.msra.mxu0 %v922
    %2587 = vmatprep.subr.mxu0 %v931
    %2588 = vmatpush1.msra.mxu0 %v930
    %2589 = vmatprep.subr.mxu0 %v939
    %2590 = vmatpush1.msra.mxu0 %v938
    %2591 = vmatprep.subr.mxu0 %v947
    %2592 = vmatpush1.msra.mxu0 %v946
    %2593 = vmatprep.subr.mxu0 %v955
    %2594 = vmatpush1.msra.mxu0 %v954
    %2595 = vmatprep.subr.mxu0 %v963
    %2596 = vmatpush1.msra.mxu0 %v962
    %2597 = vmatprep.subr.mxu0 %v971
    %2598 = vmatpush1.msra.mxu0 %v970
    %2599 = vmatprep.subr.mxu0 %v979
    %2600 = vmatpush1.msra.mxu0 %v978
    %2601 = vmatprep.subr.mxu0 %v987
    %2602 = vmatpush1.msra.mxu0 %v986
    %2603 = vmatprep.subr.mxu0 %v995
    %2604 = vmatpush1.msra.mxu0 %v994
    %2605 = vmatprep.subr.mxu0 %v1003
    %2606 = vmatpush1.msra.mxu0 %v1002
    %2607 = vmatprep.subr.mxu0 %v1011
    %2608 = vmatpush1.msra.mxu0 %v1010
    %2609 = vmatprep.subr.mxu0 %v1019
    %2610 = vmatpush1.msra.mxu0 %v1018
    %2611 = vmatprep.subr.mxu0 %v1027
    %2612 = vmatpush1.msra.mxu0 %v1026
    %2613 = vmatprep.subr.mxu0 %v1035
    %2614 = vmatpush1.msra.mxu0 %v1034
    %2615 = vmatprep.subr.mxu0 %v1043
    %2616 = vmatpush1.msra.mxu0 %v1042
    %2617 = vmatprep.subr.mxu0 %v1051
    %2618 = vmatpush1.msra.mxu0 %v1050
    %2619 = vmatprep.subr.mxu0 %v1059
    %2620 = vmatpush1.msra.mxu0 %v1058
    %2621 = vmatprep.subr.mxu0 %v1067
    %2622 = vmatpush1.msra.mxu0 %v1066
    %2623 = vmatprep.subr.mxu0 %v1075
    %2624 = vmatpush1.msra.mxu0 %v1074
    %2625 = vmatprep.mubr.f32.mxu0 %v1591
    %2626 = vmatmul.mubr.f32.gmra.mrb[0].mxu0 %v1590
    %v2627 = vpop.f32.mrb[0].mxu0
    %v2628 = vadd.f32 %v2557, %v2627
    %v2629 = vpop.f32.mrb[0].mxu0
    %v2630 = vadd.f32 %v2559, %v2629
    %2631 = vdwg.mxu0
    %2632 = vmatprep.subr.mxu0 %v1083
    %2633 = vmatpush1.msra.mxu0 %v1082
    %2634 = vmatprep.subr.mxu0 %v1091
    %2635 = vmatpush1.msra.mxu0 %v1090
    %2636 = vmatprep.subr.mxu0 %v1099
    %2637 = vmatpush1.msra.mxu0 %v1098
    %2638 = vmatprep.subr.mxu0 %v1107
    %2639 = vmatpush1.msra.mxu0 %v1106
    %2640 = vmatprep.subr.mxu0 %v1115
    %2641 = vmatpush1.msra.mxu0 %v1114
    %2642 = vmatprep.subr.mxu0 %v1123
    %2643 = vmatpush1.msra.mxu0 %v1122
    %2644 = vmatprep.subr.mxu0 %v1131
    %2645 = vmatpush1.msra.mxu0 %v1130
    %2646 = vmatprep.subr.mxu0 %v1139
    %2647 = vmatpush1.msra.mxu0 %v1138
    %2648 = vmatprep.subr.mxu0 %v1147
    %2649 = vmatpush1.msra.mxu0 %v1146
    %2650 = vmatprep.subr.mxu0 %v1155
    %2651 = vmatpush1.msra.mxu0 %v1154
    %2652 = vmatprep.subr.mxu0 %v1163
    %2653 = vmatpush1.msra.mxu0 %v1162
    %2654 = vmatprep.subr.mxu0 %v1171
    %2655 = vmatpush1.msra.mxu0 %v1170
    %2656 = vmatprep.subr.mxu0 %v1179
    %2657 = vmatpush1.msra.mxu0 %v1178
    %2658 = vmatprep.subr.mxu0 %v1187
    %2659 = vmatpush1.msra.mxu0 %v1186
    %2660 = vmatprep.subr.mxu0 %v1195
    %2661 = vmatpush1.msra.mxu0 %v1194
    %2662 = vmatprep.subr.mxu0 %v1203
    %2663 = vmatpush1.msra.mxu0 %v1202
    %2664 = vmatprep.subr.mxu0 %v1211
    %2665 = vmatpush1.msra.mxu0 %v1210
    %2666 = vmatprep.subr.mxu0 %v1219
    %2667 = vmatpush1.msra.mxu0 %v1218
    %2668 = vmatprep.subr.mxu0 %v1227
    %2669 = vmatpush1.msra.mxu0 %v1226
    %2670 = vmatprep.subr.mxu0 %v1235
    %2671 = vmatpush1.msra.mxu0 %v1234
    %2672 = vmatprep.subr.mxu0 %v1243
    %2673 = vmatpush1.msra.mxu0 %v1242
    %2674 = vmatprep.subr.mxu0 %v1251
    %2675 = vmatpush1.msra.mxu0 %v1250
    %2676 = vmatprep.subr.mxu0 %v1259
    %2677 = vmatpush1.msra.mxu0 %v1258
    %2678 = vmatprep.subr.mxu0 %v1267
    %2679 = vmatpush1.msra.mxu0 %v1266
    %2680 = vmatprep.subr.mxu0 %v1275
    %2681 = vmatpush1.msra.mxu0 %v1274
    %2682 = vmatprep.subr.mxu0 %v1283
    %2683 = vmatpush1.msra.mxu0 %v1282
    %2684 = vmatprep.subr.mxu0 %v1291
    %2685 = vmatpush1.msra.mxu0 %v1290
    %2686 = vmatprep.subr.mxu0 %v1299
    %2687 = vmatpush1.msra.mxu0 %v1298
    %2688 = vmatprep.subr.mxu0 %v1307
    %2689 = vmatpush1.msra.mxu0 %v1306
    %2690 = vmatprep.subr.mxu0 %v1315
    %2691 = vmatpush1.msra.mxu0 %v1314
    %2692 = vmatprep.subr.mxu0 %v1323
    %2693 = vmatpush1.msra.mxu0 %v1322
    %2694 = vmatprep.subr.mxu0 %v1331
    %2695 = vmatpush1.msra.mxu0 %v1330
    %2696 = vmatprep.mubr.f32.mxu0 %v1593
    %2697 = vmatmul.mubr.f32.gmra.mrb[0].mxu0 %v1592
    %v2698 = vpop.f32.mrb[0].mxu0
    %v2699 = vadd.f32 %v2628, %v2698
    %v2700 = vpop.f32.mrb[0].mxu0
    %v2701 = vadd.f32 %v2630, %v2700
    %2702 = vdwg.mxu0
    %2703 = vmatprep.subr.mxu0 %v1339
    %2704 = vmatpush1.msra.mxu0 %v1338
    %2705 = vmatprep.subr.mxu0 %v1347
    %2706 = vmatpush1.msra.mxu0 %v1346
    %2707 = vmatprep.subr.mxu0 %v1355
    %2708 = vmatpush1.msra.mxu0 %v1354
    %2709 = vmatprep.subr.mxu0 %v1363
    %2710 = vmatpush1.msra.mxu0 %v1362
    %2711 = vmatprep.subr.mxu0 %v1371
    %2712 = vmatpush1.msra.mxu0 %v1370
    %2713 = vmatprep.subr.mxu0 %v1379
    %2714 = vmatpush1.msra.mxu0 %v1378
    %2715 = vmatprep.subr.mxu0 %v1387
    %2716 = vmatpush1.msra.mxu0 %v1386
    %2717 = vmatprep.subr.mxu0 %v1395
    %2718 = vmatpush1.msra.mxu0 %v1394
    %2719 = vmatprep.subr.mxu0 %v1403
    %2720 = vmatpush1.msra.mxu0 %v1402
    %2721 = vmatprep.subr.mxu0 %v1411
    %2722 = vmatpush1.msra.mxu0 %v1410
    %2723 = vmatprep.subr.mxu0 %v1419
    %2724 = vmatpush1.msra.mxu0 %v1418
    %2725 = vmatprep.subr.mxu0 %v1427
    %2726 = vmatpush1.msra.mxu0 %v1426
    %2727 = vmatprep.subr.mxu0 %v1435
    %2728 = vmatpush1.msra.mxu0 %v1434
    %2729 = vmatprep.subr.mxu0 %v1443
    %2730 = vmatpush1.msra.mxu0 %v1442
    %2731 = vmatprep.subr.mxu0 %v1451
    %2732 = vmatpush1.msra.mxu0 %v1450
    %2733 = vmatprep.subr.mxu0 %v1459
    %2734 = vmatpush1.msra.mxu0 %v1458
    %2735 = vmatprep.subr.mxu0 %v1467
    %2736 = vmatpush1.msra.mxu0 %v1466
    %2737 = vmatprep.subr.mxu0 %v1475
    %2738 = vmatpush1.msra.mxu0 %v1474
    %2739 = vmatprep.subr.mxu0 %v1483
    %2740 = vmatpush1.msra.mxu0 %v1482
    %2741 = vmatprep.subr.mxu0 %v1491
    %2742 = vmatpush1.msra.mxu0 %v1490
    %2743 = vmatprep.subr.mxu0 %v1499
    %2744 = vmatpush1.msra.mxu0 %v1498
    %2745 = vmatprep.subr.mxu0 %v1507
    %2746 = vmatpush1.msra.mxu0 %v1506
    %2747 = vmatprep.subr.mxu0 %v1515
    %2748 = vmatpush1.msra.mxu0 %v1514
    %2749 = vmatprep.subr.mxu0 %v1523
    %2750 = vmatpush1.msra.mxu0 %v1522
    %2751 = vmatprep.subr.mxu0 %v1531
    %2752 = vmatpush1.msra.mxu0 %v1530
    %2753 = vmatprep.subr.mxu0 %v1539
    %2754 = vmatpush1.msra.mxu0 %v1538
    %2755 = vmatprep.subr.mxu0 %v1547
    %2756 = vmatpush1.msra.mxu0 %v1546
    %2757 = vmatprep.subr.mxu0 %v1555
    %2758 = vmatpush1.msra.mxu0 %v1554
    %2759 = vmatprep.subr.mxu0 %v1563
    %2760 = vmatpush1.msra.mxu0 %v1562
    %2761 = vmatprep.subr.mxu0 %v1571
    %2762 = vmatpush1.msra.mxu0 %v1570
    %2763 = vmatprep.subr.mxu0 %v1579
    %2764 = vmatpush1.msra.mxu0 %v1578
    %2765 = vmatprep.subr.mxu0 %v1587
    %2766 = vmatpush1.msra.mxu0 %v1586
    %2767 = vmatprep.mubr.f32.mxu0 %v1595
    %2768 = vmatmul.mubr.f32.gmra.mrb[0].mxu0 %v1594
    %v2769 = vpop.f32.mrb[0].mxu0
    %v2770 = vadd.f32 %v2699, %v2769
    %v2771 = vpop.f32.mrb[0].mxu0
    %v2772 = vadd.f32 %v2701, %v2771
    %2773 = vdwg.mxu0
    %2774 = vst [vmem:[#allocation8] sm:$0xff] %v1918
    %2775 = vst [vmem:[#allocation8 + $0x8] sm:$0xff] %v1920
    %2776 = vst [vmem:[#allocation8 + $0x10] sm:$0xff] %v2202
    %2777 = vst [vmem:[#allocation8 + $0x18] sm:$0xff] %v2204
    %2778 = vst [vmem:[#allocation8 + $0x20] sm:$0xff] %v2486
    %2779 = vst [vmem:[#allocation8 + $0x28] sm:$0xff] %v2488
    %2780 = vst [vmem:[#allocation8 + $0x30] sm:$0xff] %v2770
    %2781 = vst [vmem:[#allocation8 + $0x38] sm:$0xff] %v2772
    // Predicated region
    $region26: #{tpu_custom_call.1} parent=1 // pred_check
      _
    $region27: #{tpu_custom_call.1} parent=1 // pred_check_branch
      %2783 = sbr.rel (0) target = $region29
    $region28: #{tpu_custom_call.1} parent=1 // pred_region
      %s2785 = ssub.s32 1024, 1024
      %2786 = vsyncadd [#allocation4], %s2785
      %s2788 = sshll.u32 [#allocation8], 4
      %s2789 = int_to_ptr.vmem [resolvable:$true] %s2788
      %2791 = dma.vmem_to_hbm [thread:$0]  %s2789, 1024, %s3, [#allocation4]
    $region29: #{tpu_custom_call.1} parent=1 // pred_fallthru
      _
    // Predicated region
    $region30: #{tpu_custom_call.1} parent=1 // pred_check
      _
    $region31: #{tpu_custom_call.1} parent=1 // pred_check_branch
      %2793 = sbr.rel (0) target = $region33
    $region32: #{tpu_custom_call.1} parent=1 // pred_region
      %2794 = dma.done [#allocation4], 1024
    $region33: #{tpu_custom_call.1} parent=1 // pred_fallthru
      _
    %2795 = vsyncpa [#allocation3], 1
    %2796 = vsyncpa [#allocation6], 1
    %2797 = vsyncpa [#allocation4], 1

</llo_original>
